<compile_context>
chip_gen: v7x
topology: tpu7x:2x2x1
jax: 0.10.0
libtpu: 0.0.40
codegen_flags: <defaults>
</compile_context>

<pallas_src>
import math

import jax
import jax.numpy as jnp
from jax.experimental import pallas as pl
from jax.experimental.pallas import tpu as pltpu

SCALE = 2          # nn.Upsample(scale_factor=2, mode='nearest')
_LANE = 128


def _upsample_rows_kernel(x_ref, m_ref, o_ref):
    # x_ref: (TR, G*Wf)        G packed input H-rows per kernel row, (r,i) interleaved
    # m_ref: (G*Wf, G*4*Wf)    constant 0/1 selection matrix (W + H duplication)
    # o_ref: (TR, G*4*Wf)      per input row: [U, U], U = pair-duplicated row
    o_ref[...] = jnp.dot(
        x_ref[...],
        m_ref[...],
        preferred_element_type=jnp.float32,
        precision=jax.lax.Precision.HIGHEST,   # keep the 0/1 selection bit-exact
    ).astype(o_ref.dtype)


def _selection_matrix(wf, group, dtype):
    """Block-diagonal 0/1 matrix encoding nearest-2x duplication in W and H."""
    out_w = SCALE * SCALE * wf                 # one input row -> [U, U]
    col = jnp.arange(group * out_w)
    g = col // out_w                           # which packed input row
    j = col % out_w
    k = j % (SCALE * wf)                       # position within one duplicated row U
    # U[k] = X[2*(k // (2*SCALE)) + (k % 2)]  ([r0,i0,r0,i0,r1,i1,r1,i1,...])
    src = g * wf + 2 * (k // (2 * SCALE)) + (k % 2)
    return (jnp.arange(group * wf)[:, None] == src[None, :]).astype(dtype)


def complex_upsample_nearest(x):
    """x: (N, C, H, W, 2) -> (N, C, 2H, 2W, 2), nearest 2x on real & imag."""
    n, c, h, w, two = x.shape
    assert two == 2, "last dim must hold (real, imag)"
    dtype = x.dtype
    itemsize = jnp.dtype(dtype).itemsize
    sublane = max(8, 32 // itemsize)           # 8 for f32, 16 for bf16, 32 for int8

    wf = 2 * w                                 # fused (W, complex) width of one row
    out_w = SCALE * SCALE * wf                 # output width per input row
    r = n * c * h

    # Pack G consecutive rows so the fused lane width is a multiple of 128.
    group = _LANE // math.gcd(wf, _LANE)
    r_pad = pl.cdiv(r, group) * group

    x2 = x.reshape(r, wf)                      # free row-major reshape
    if r_pad != r:
        x2 = jnp.pad(x2, ((0, r_pad - r), (0, 0)))
    rg = r_pad // group
    x2 = x2.reshape(rg, group * wf)            # still a free row-major reshape

    m = _selection_matrix(wf, group, dtype)    # (G*Wf, G*4*Wf)

    # Rows per grid step from a padding-aware, double-buffered VMEM budget.
    in_w_pad = pl.cdiv(group * wf, _LANE) * _LANE
    out_w_pad = pl.cdiv(group * out_w, _LANE) * _LANE
    bytes_per_row = (in_w_pad + out_w_pad) * itemsize
    try:
        vmem_cap = int(pltpu.get_tpu_info().vmem_capacity_bytes)
    except Exception:
        vmem_cap = 64 * 1024 * 1024            # conservative (v7x physical)
    # Conservative block budget: fits v5e's 16 MiB scoped default with headroom
    # for M + compiler scratch; far above per-step overhead on all generations.
    block_budget = min(vmem_cap // 8, 6 * 1024 * 1024)

    tr = max(1, block_budget // (2 * bytes_per_row))    # 2x: double-buffered
    tr = min(tr, max(1, pl.cdiv(rg, 4)))                # >=4 steps (v7x 2 TCs, overlap)
    tr = max(sublane, (tr // sublane) * sublane)        # dtype sublane multiple
    if tr >= rg:
        tr = rg                                         # single full-extent block

    grid = (pl.cdiv(rg, tr),)
    cost = pl.CostEstimate(
        flops=2 * rg * (group * wf) * (group * out_w),
        transcendentals=0,
        bytes_accessed=(x2.size + rg * group * out_w + m.size) * itemsize,
    )

    y = pl.pallas_call(
        _upsample_rows_kernel,
        out_shape=jax.ShapeDtypeStruct((rg, group * out_w), dtype),
        grid=grid,
        in_specs=[
            pl.BlockSpec((tr, group * wf), lambda i: (i, 0)),
            # Same block every step -> stays resident in VMEM, not re-DMA'd.
            pl.BlockSpec((group * wf, group * out_w), lambda i: (0, 0)),
        ],
        out_specs=pl.BlockSpec((tr, group * out_w), lambda i: (i, 0)),
        compiler_params=pltpu.CompilerParams(
            dimension_semantics=("parallel",),          # rows independent
            vmem_limit_bytes=32 * 1024 * 1024,
        ),
        cost_estimate=cost,
    )(x2, m)

    # Free row-major reshapes back: (Rg, G*4*Wf) -> (R, 4*Wf) -> output tensor.
    y = y.reshape(r_pad, out_w)[:r]
    return y.reshape(n, c, SCALE * h, SCALE * w, 2)


def _reference(x):
    # Pure-JAX reference matching nn.Upsample(scale_factor=2, 'nearest') applied
    # to real and imag independently.
    y = jnp.repeat(x, SCALE, axis=2)   # H
    y = jnp.repeat(y, SCALE, axis=3)   # W
    return y


if __name__ == "__main__":
    key = jax.random.PRNGKey(0)
    # (N, C, H, W, 2) complex-as-last-dim input, matching the PyTorch module.
    x = jax.random.normal(key, (2, 4, 16, 16, 2), dtype=jnp.float32)

    out = jax.block_until_ready(complex_upsample_nearest(x))

    ref = _reference(x)
    assert out.shape == (2, 4, 32, 32, 2), out.shape
    assert out.dtype == x.dtype
    assert bool(jnp.allclose(out, ref)), "mismatch vs nearest-upsample reference"

    print("KERNEL_OK")
</pallas_src>

<mosaic_0001>
module attributes {stable_mosaic.version = 11 : i64} {
  func.func @_upsample_rows_kernel(%arg0: i32, %arg1: memref<8x128xf32, #tpu.memory_space<vmem>>, %arg2: memref<128x512xf32, #tpu.memory_space<vmem>>, %arg3: memref<8x512xf32, #tpu.memory_space<vmem>>) attributes {dimension_semantics = [#tpu.dimension_semantics<parallel>], iteration_bounds = array<i64: 4>, scalar_prefetch = 0 : i64, scratch_operands = 0 : i64, tpu.core_type = #tpu.core_type<tc>, window_params = [{transform_indices = @transform_0, window_bounds = array<i64: 8, 128>}, {pipeline_mode = #tpu.pipeline_mode<synchronous>, transform_indices = @transform_1, window_bounds = array<i64: 128, 512>}, {transform_indices = @transform_2, window_bounds = array<i64: 8, 512>}]} {
    %c0 = arith.constant 0 : index
    %c0_0 = arith.constant 0 : index
    %0 = vector.load %arg1[%c0, %c0_0] : memref<8x128xf32, #tpu.memory_space<vmem>>, vector<8x128xf32>
    %c0_1 = arith.constant 0 : index
    %c0_2 = arith.constant 0 : index
    %1 = vector.load %arg2[%c0_1, %c0_2] : memref<128x512xf32, #tpu.memory_space<vmem>>, vector<128x512xf32>
    %cst = arith.constant dense<0.000000e+00> : vector<8x512xf32>
    %2 = tpu.matmul %0, %1, %cst {dimension_numbers = #tpu.dot_dimension_numbers<[1], [0], [0], [1], [0, 0, 1, 1], [], []>, precision = #tpu.contract_precision<fp32>} : vector<8x128xf32>, vector<128x512xf32>, vector<8x512xf32> -> vector<8x512xf32>
    %c0_3 = arith.constant 0 : index
    %c0_4 = arith.constant 0 : index
    %3 = vector.load %arg3[%c0_3, %c0_4] : memref<8x512xf32, #tpu.memory_space<vmem>>, vector<8x512xf32>
    tpu.vector_store %arg3[%c0_3, %c0_4], %2 {strides = array<i32>} : memref<8x512xf32, #tpu.memory_space<vmem>>, vector<8x512xf32>,
    return
  }
  func.func @transform_0(%arg0: i32) -> (i32, i32) {
    %c0_i32 = arith.constant 0 : i32
    %c0_i32_0 = arith.constant 0 : i32
    return %arg0, %c0_i32 : i32, i32
  }
  func.func @transform_1(%arg0: i32) -> (i32, i32) {
    %c0_i32 = arith.constant 0 : i32
    %c0_i32_0 = arith.constant 0 : i32
    %c0_i32_1 = arith.constant 0 : i32
    return %c0_i32, %c0_i32_0 : i32, i32
  }
  func.func @transform_2(%arg0: i32) -> (i32, i32) {
    %c0_i32 = arith.constant 0 : i32
    %c0_i32_0 = arith.constant 0 : i32
    return %arg0, %c0_i32 : i32, i32
  }
}

</mosaic_0001>

<llo_original>
// kernel: tpu_custom_call.1
$region0: #{tpu_custom_call.1}
  #allocation0 [shape = 'u32[]', space=smem, size = 0x4, offset = 0x4, fixed_abs, tag = 'smem constant byte address 0x4 - core index']
  #allocation1 [shape = 'u32[144,128]{1,0:T(1,128)}', space=vmem, size = 0x12000, scoped, tag = 'internal scratch']
  %s0 = inlined_call_operand.hbm [shape: f32[32,128], index: 0, kind: input, shape index: {}]
  %s1 = inlined_call_operand.hbm [shape: f32[128,512], index: 1, kind: input, shape index: {}]
  %s2 = inlined_call_operand.hbm [shape: f32[32,512], index: 2, kind: output, shape index: {}]
  %s3 = sld [smem:[#allocation0]]
  $region49: #{tpu_custom_call.1} parent=0
    _
  %s5 = ssub.s32 1, %s3
  %s6 = scalar_select 0, %s5, %s3
  $region1: #{tpu_custom_call.1} parent=0
    #allocation2 [shape = 'u8[8192]{0}', space=vmem, size = 0x2000, scoped, tag = 'input window, operand 0']
    #allocation3 [shape = 's32[2]{0}', space=sflag, size = 0x8, scoped, tag = 'scoped memory for tpu_custom_call.1']
    #allocation4 [shape = 's32[2]{0}', space=sflag, size = 0x8, scoped, tag = 'scoped memory for tpu_custom_call.1']
    #allocation5 [shape = 'u8[262144]{0}', space=vmem, size = 0x40000, scoped, tag = 'input window, operand 1, single buffered']
    #allocation6 [shape = 's32[1]{0}', space=sflag, size = 0x4, scoped, tag = 'scoped memory for tpu_custom_call.1']
    #allocation7 [shape = 'u8[32768]{0}', space=vmem, size = 0x8000, scoped, tag = 'output window, operand 0']
    %7 = vsyncpa [#allocation3], 0
    %s8 = scalar_lea.sflag [#allocation3], 1
    %9 = vsyncpa %s8, 0
    %10 = vsyncpa [#allocation6], 0
    %11 = vsyncpa [#allocation4], 0
    %s12 = scalar_lea.sflag [#allocation4], 1
    %13 = vsyncpa %s12, 0
    loop: start=0, step=1, limit=6
    $region2: #{tpu_custom_call.1} parent=1 // loop_pre_header
      _
    $region3: #{tpu_custom_call.1} parent=1 // loop_header
      %s15 = sphi 0, %s19
      %p16 = scmp.ge.s32.totalorder %s15, 6
      %s25 = sphi 0, %s27
      %s28 = sphi 0, %s25
      %s29 = sphi 0, %s28
      %s45 = sphi 0, %s29
      %s49 = sphi 0, %s49
      %s51 = sphi 0, %s49
      %s52 = sphi 0, %s51
      %s66 = sphi 0, %s52
      %s72 = sphi 0, %s74
      %s75 = sphi 0, %s72
      %s76 = sphi 0, %s75
      %s92 = sphi 0, %s76
    $region4: #{tpu_custom_call.1} parent=1 // loop_header_branch
      %18 = sbr.rel (%p16) target = $region8
    $region5: #{tpu_custom_call.1} parent=1 // loop_body
      %s20 = ssub.s32 %s15, 1
      %s21 = ssub.s32 %s15, 2
      %s22 = sadd.s32 %s15, 1
      %s23 = ssub.s32 %s15, %s22
      %p24 = scmp.eq.s32.totalorder %s23, 0
      %s26 = sadd.s32 %s25, 1
      %s27 = scalar_select %p24, %s25, %s26
      %p30 = pneg %p24
      %p31 = scmp.eq.s32.totalorder %s15, 3
      %p32 = por %p30, %p31
      %p33 = scmp.ne.s32.totalorder %s25, %s28
      %p34 = scmp.eq.s32.totalorder %s15, 0
      %p35 = por %p33, %p34
      %p36 = scmp.ne.s32.totalorder %s25, %s28
      %p37 = scmp.eq.s32.totalorder %s20, 3
      %p38 = por %p36, %p37
      %p39 = scmp.ne.s32.totalorder %s28, %s29
      %p40 = scmp.eq.s32.totalorder %s20, 0
      %p41 = por %p39, %p40
      %p42 = scmp.ne.s32.totalorder %s28, %s29
      %p43 = scmp.eq.s32.totalorder %s21, 3
      %p44 = por %p42, %p43
      %p46 = scmp.ne.s32.totalorder %s29, %s45
      %p47 = scmp.eq.s32.totalorder %s21, 0
      %p48 = por %p46, %p47
      %s50 = sadd.s32 %s49, 1
      %p53 = scmp.eq.s32.totalorder %s15, 3
      %p54 = scmp.ne.s32.totalorder %s49, %s51
      %p55 = scmp.eq.s32.totalorder %s15, 0
      %p56 = por %p54, %p55
      %p57 = scmp.ne.s32.totalorder %s49, %s51
      %p58 = scmp.eq.s32.totalorder %s20, 3
      %p59 = por %p57, %p58
      %p60 = scmp.ne.s32.totalorder %s51, %s52
      %p61 = scmp.eq.s32.totalorder %s20, 0
      %p62 = por %p60, %p61
      %p63 = scmp.ne.s32.totalorder %s51, %s52
      %p64 = scmp.eq.s32.totalorder %s21, 3
      %p65 = por %p63, %p64
      %p67 = scmp.ne.s32.totalorder %s52, %s66
      %p68 = scmp.eq.s32.totalorder %s21, 0
      %p69 = por %p67, %p68
      %s70 = ssub.s32 %s15, %s22
      %p71 = scmp.eq.s32.totalorder %s70, 0
      %s73 = sadd.s32 %s72, 1
      %s74 = scalar_select %p71, %s72, %s73
      %p77 = pneg %p71
      %p78 = scmp.eq.s32.totalorder %s15, 3
      %p79 = por %p77, %p78
      %p80 = scmp.ne.s32.totalorder %s72, %s75
      %p81 = scmp.eq.s32.totalorder %s15, 0
      %p82 = por %p80, %p81
      %p83 = scmp.ne.s32.totalorder %s72, %s75
      %p84 = scmp.eq.s32.totalorder %s20, 3
      %p85 = por %p83, %p84
      %p86 = scmp.ne.s32.totalorder %s75, %s76
      %p87 = scmp.eq.s32.totalorder %s20, 0
      %p88 = por %p86, %p87
      %p89 = scmp.ne.s32.totalorder %s75, %s76
      %p90 = scmp.eq.s32.totalorder %s21, 3
      %p91 = por %p89, %p90
      %p93 = scmp.ne.s32.totalorder %s76, %s92
      %p94 = scmp.eq.s32.totalorder %s21, 0
      %p95 = por %p93, %p94
      %p96 = scmp.le.s32.totalorder 1, %s15
      %p97 = scmp.lt.s32.totalorder %s15, 5
      %p98 = pnand %p96, %p97
      %p99 = pneg %p98
      // Predicated region
      $region9: #{tpu_custom_call.1} parent=5 // pred_check
        _
      $region10: #{tpu_custom_call.1} parent=5 // pred_check_branch
        %101 = sbr.rel (%p98) target = $region12
      $region11: #{tpu_custom_call.1} parent=5 // pred_region
        %s102 = ssub.s32 %s15, 1
        // Predicated region
        $region13: #{tpu_custom_call.1} parent=11 // pred_check
          %p103 = pneg %p62
        $region14: #{tpu_custom_call.1} parent=11 // pred_check_branch
          %105 = sbr.rel (%p103) target = $region16
        $region15: #{tpu_custom_call.1} parent=11 // pred_region
          %s107 = ssub.s32 8192, 8192
          %108 = vsyncadd [#allocation6], %s107
          %s109 = sshll.u32 [#allocation5], 4
          %s110 = int_to_ptr.vmem [resolvable:$true] %s109
          %115 = dma.hbm_to_vmem [thread:$0]  %s1, 8192, %s110, [#allocation6], 512, 512, 32
        $region16: #{tpu_custom_call.1} parent=11 // pred_fallthru
          _
      $region12: #{tpu_custom_call.1} parent=5 // pred_fallthru
        _
      %p116 = scmp.lt.s32.totalorder %s15, 4
      // Predicated region
      $region17: #{tpu_custom_call.1} parent=5 // pred_check
        %p117 = pneg %p116
      $region18: #{tpu_custom_call.1} parent=5 // pred_check_branch
        %119 = sbr.rel (%p117) target = $region20
      $region19: #{tpu_custom_call.1} parent=5 // pred_region
        // Predicated region
        $region21: #{tpu_custom_call.1} parent=19 // pred_check
          %p120 = pneg %p35
        $region22: #{tpu_custom_call.1} parent=19 // pred_check_branch
          %122 = sbr.rel (%p120) target = $region24
        $region23: #{tpu_custom_call.1} parent=19 // pred_region
          %s123 = sand.u32 %s25, 1
          %s124 = scalar_lea.sflag [#allocation3], %s123
          %s125 = sand.u32 %s25, 1
          %s126 = smul.addr %s125, 8
          %s127 = scalar_lea.vmem [#allocation2], %s126
          %s129 = ssub.s32 128, 128
          %130 = vsyncadd %s124, %s129
          %s131 = smul.addr %s15, 128
          %s132 = scalar_lea.hbm %s0, %s131
          %s134 = sshll.u32 %s127, 4
          %s135 = int_to_ptr.vmem [resolvable:$true] %s134
          %137 = dma.hbm_to_vmem [thread:$0]  %s132, 128, %s135, %s124
        $region24: #{tpu_custom_call.1} parent=19 // pred_fallthru
          _
      $region20: #{tpu_custom_call.1} parent=5 // pred_fallthru
        _
      %p138 = scmp.le.s32.totalorder 1, %s15
      %p139 = scmp.lt.s32.totalorder %s15, 5
      %p140 = pnand %p138, %p139
      %p141 = pneg %p140
      // Predicated region
      $region25: #{tpu_custom_call.1} parent=5 // pred_check
        _
      $region26: #{tpu_custom_call.1} parent=5 // pred_check_branch
        %143 = sbr.rel (%p140) target = $region28
      $region27: #{tpu_custom_call.1} parent=5 // pred_region
        %s144 = ssub.s32 %s15, 1
        %s145 = sand.u32 %s28, 1
        %s146 = scalar_lea.sflag [#allocation3], %s145
        %s147 = sand.u32 %s28, 1
        %s148 = smul.addr %s147, 8
        %s149 = scalar_lea.vmem [#allocation2], %s148
        // Predicated region
        $region29: #{tpu_custom_call.1} parent=27 // pred_check
          %p150 = pneg %p41
        $region30: #{tpu_custom_call.1} parent=27 // pred_check_branch
          %152 = sbr.rel (%p150) target = $region32
        $region31: #{tpu_custom_call.1} parent=27 // pred_region
          %153 = dma.done %s146, 128
        $region32: #{tpu_custom_call.1} parent=27 // pred_fallthru
          _
        // Predicated region
        $region33: #{tpu_custom_call.1} parent=27 // pred_check
          %p154 = pneg %p62
        $region34: #{tpu_custom_call.1} parent=27 // pred_check_branch
          %156 = sbr.rel (%p154) target = $region36
        $region35: #{tpu_custom_call.1} parent=27 // pred_region
          %157 = dma.done [#allocation6], 8192
        $region36: #{tpu_custom_call.1} parent=27 // pred_fallthru
          _
        %s158 = sand.u32 %s28, 1
        %s159 = scalar_lea.sflag [#allocation3], %s158
        %s160 = sand.u32 %s28, 1
        %s161 = smul.addr %s160, 8
        %s162 = scalar_lea.vmem [#allocation2], %s161
        %p163 = pneg %p41
        %p164 = pneg %p38
        %p165 = pneg %p62
        %p166 = pneg %p59
        %p167 = pneg %p88
        %p168 = pneg %p85
        %s169 = sand.u32 %s75, 1
        %s170 = scalar_lea.sflag [#allocation4], %s169
        %s171 = sand.u32 %s75, 1
        %s172 = smul.addr %s171, 32
        %s173 = scalar_lea.vmem [#allocation7], %s172
        %v174 = vld [vmem:[%s149] sm:$0xff]
        %v175 = vld [vmem:[#allocation5] sm:$0xff]
        %v176 = vld [vmem:[#allocation5 + $0x8] sm:$0xff]
        %v177 = vld [vmem:[#allocation5 + $0x10] sm:$0xff]
        %v178 = vld [vmem:[#allocation5 + $0x18] sm:$0xff]
        %v179 = vld [vmem:[#allocation5 + $0x20] sm:$0xff]
        %v180 = vld [vmem:[#allocation5 + $0x28] sm:$0xff]
        %v181 = vld [vmem:[#allocation5 + $0x30] sm:$0xff]
        %v182 = vld [vmem:[#allocation5 + $0x38] sm:$0xff]
        %v183 = vld [vmem:[#allocation5 + $0x40] sm:$0xff]
        %v184 = vld [vmem:[#allocation5 + $0x48] sm:$0xff]
        %v185 = vld [vmem:[#allocation5 + $0x50] sm:$0xff]
        %v186 = vld [vmem:[#allocation5 + $0x58] sm:$0xff]
        %v187 = vld [vmem:[#allocation5 + $0x60] sm:$0xff]
        %v188 = vld [vmem:[#allocation5 + $0x68] sm:$0xff]
        %v189 = vld [vmem:[#allocation5 + $0x70] sm:$0xff]
        %v190 = vld [vmem:[#allocation5 + $0x78] sm:$0xff]
        %v191 = vld [vmem:[#allocation5 + $0x80] sm:$0xff]
        %v192 = vld [vmem:[#allocation5 + $0x88] sm:$0xff]
        %v193 = vld [vmem:[#allocation5 + $0x90] sm:$0xff]
        %v194 = vld [vmem:[#allocation5 + $0x98] sm:$0xff]
        %v195 = vld [vmem:[#allocation5 + $0xa0] sm:$0xff]
        %v196 = vld [vmem:[#allocation5 + $0xa8] sm:$0xff]
        %v197 = vld [vmem:[#allocation5 + $0xb0] sm:$0xff]
        %v198 = vld [vmem:[#allocation5 + $0xb8] sm:$0xff]
        %v199 = vld [vmem:[#allocation5 + $0xc0] sm:$0xff]
        %v200 = vld [vmem:[#allocation5 + $0xc8] sm:$0xff]
        %v201 = vld [vmem:[#allocation5 + $0xd0] sm:$0xff]
        %v202 = vld [vmem:[#allocation5 + $0xd8] sm:$0xff]
        %v203 = vld [vmem:[#allocation5 + $0xe0] sm:$0xff]
        %v204 = vld [vmem:[#allocation5 + $0xe8] sm:$0xff]
        %v205 = vld [vmem:[#allocation5 + $0xf0] sm:$0xff]
        %v206 = vld [vmem:[#allocation5 + $0xf8] sm:$0xff]
        %v207 = vld [vmem:[#allocation5 + $0x100] sm:$0xff]
        %v208 = vld [vmem:[#allocation5 + $0x108] sm:$0xff]
        %v209 = vld [vmem:[#allocation5 + $0x110] sm:$0xff]
        %v210 = vld [vmem:[#allocation5 + $0x118] sm:$0xff]
        %v211 = vld [vmem:[#allocation5 + $0x120] sm:$0xff]
        %v212 = vld [vmem:[#allocation5 + $0x128] sm:$0xff]
        %v213 = vld [vmem:[#allocation5 + $0x130] sm:$0xff]
        %v214 = vld [vmem:[#allocation5 + $0x138] sm:$0xff]
        %v215 = vld [vmem:[#allocation5 + $0x140] sm:$0xff]
        %v216 = vld [vmem:[#allocation5 + $0x148] sm:$0xff]
        %v217 = vld [vmem:[#allocation5 + $0x150] sm:$0xff]
        %v218 = vld [vmem:[#allocation5 + $0x158] sm:$0xff]
        %v219 = vld [vmem:[#allocation5 + $0x160] sm:$0xff]
        %v220 = vld [vmem:[#allocation5 + $0x168] sm:$0xff]
        %v221 = vld [vmem:[#allocation5 + $0x170] sm:$0xff]
        %v222 = vld [vmem:[#allocation5 + $0x178] sm:$0xff]
        %v223 = vld [vmem:[#allocation5 + $0x180] sm:$0xff]
        %v224 = vld [vmem:[#allocation5 + $0x188] sm:$0xff]
        %v225 = vld [vmem:[#allocation5 + $0x190] sm:$0xff]
        %v226 = vld [vmem:[#allocation5 + $0x198] sm:$0xff]
        %v227 = vld [vmem:[#allocation5 + $0x1a0] sm:$0xff]
        %v228 = vld [vmem:[#allocation5 + $0x1a8] sm:$0xff]
        %v229 = vld [vmem:[#allocation5 + $0x1b0] sm:$0xff]
        %v230 = vld [vmem:[#allocation5 + $0x1b8] sm:$0xff]
        %v231 = vld [vmem:[#allocation5 + $0x1c0] sm:$0xff]
        %v232 = vld [vmem:[#allocation5 + $0x1c8] sm:$0xff]
        %v233 = vld [vmem:[#allocation5 + $0x1d0] sm:$0xff]
        %v234 = vld [vmem:[#allocation5 + $0x1d8] sm:$0xff]
        %v235 = vld [vmem:[#allocation5 + $0x1e0] sm:$0xff]
        %v236 = vld [vmem:[#allocation5 + $0x1e8] sm:$0xff]
        %v237 = vld [vmem:[#allocation5 + $0x1f0] sm:$0xff]
        %v238 = vld [vmem:[#allocation5 + $0x1f8] sm:$0xff]
        %v239 = vand.u32 %v176, 4294901760
        %240 = vmatprep.subr.mxu0 %v239
        %v241 = vand.u32 %v175, 4294901760
        %242 = vmatpush1.msra.mxu0 %v241
        %v243 = vand.u32 %v180, 4294901760
        %244 = vmatprep.subr.mxu0 %v243
        %v245 = vand.u32 %v179, 4294901760
        %246 = vmatpush1.msra.mxu0 %v245
        %v247 = vand.u32 %v184, 4294901760
        %248 = vmatprep.subr.mxu0 %v247
        %v249 = vand.u32 %v183, 4294901760
        %250 = vmatpush1.msra.mxu0 %v249
        %v251 = vand.u32 %v188, 4294901760
        %252 = vmatprep.subr.mxu0 %v251
        %v253 = vand.u32 %v187, 4294901760
        %254 = vmatpush1.msra.mxu0 %v253
        %v255 = vand.u32 %v192, 4294901760
        %256 = vmatprep.subr.mxu0 %v255
        %v257 = vand.u32 %v191, 4294901760
        %258 = vmatpush1.msra.mxu0 %v257
        %v259 = vand.u32 %v196, 4294901760
        %260 = vmatprep.subr.mxu0 %v259
        %v261 = vand.u32 %v195, 4294901760
        %262 = vmatpush1.msra.mxu0 %v261
        %v263 = vand.u32 %v200, 4294901760
        %264 = vmatprep.subr.mxu0 %v263
        %v265 = vand.u32 %v199, 4294901760
        %266 = vmatpush1.msra.mxu0 %v265
        %v267 = vand.u32 %v204, 4294901760
        %268 = vmatprep.subr.mxu0 %v267
        %v269 = vand.u32 %v203, 4294901760
        %270 = vmatpush1.msra.mxu0 %v269
        %v271 = vand.u32 %v208, 4294901760
        %272 = vmatprep.subr.mxu0 %v271
        %v273 = vand.u32 %v207, 4294901760
        %274 = vmatpush1.msra.mxu0 %v273
        %v275 = vand.u32 %v212, 4294901760
        %276 = vmatprep.subr.mxu0 %v275
        %v277 = vand.u32 %v211, 4294901760
        %278 = vmatpush1.msra.mxu0 %v277
        %v279 = vand.u32 %v216, 4294901760
        %280 = vmatprep.subr.mxu0 %v279
        %v281 = vand.u32 %v215, 4294901760
        %282 = vmatpush1.msra.mxu0 %v281
        %v283 = vand.u32 %v220, 4294901760
        %284 = vmatprep.subr.mxu0 %v283
        %v285 = vand.u32 %v219, 4294901760
        %286 = vmatpush1.msra.mxu0 %v285
        %v287 = vand.u32 %v224, 4294901760
        %288 = vmatprep.subr.mxu0 %v287
        %v289 = vand.u32 %v223, 4294901760
        %290 = vmatpush1.msra.mxu0 %v289
        %v291 = vand.u32 %v228, 4294901760
        %292 = vmatprep.subr.mxu0 %v291
        %v293 = vand.u32 %v227, 4294901760
        %294 = vmatpush1.msra.mxu0 %v293
        %v295 = vand.u32 %v232, 4294901760
        %296 = vmatprep.subr.mxu0 %v295
        %v297 = vand.u32 %v231, 4294901760
        %298 = vmatpush1.msra.mxu0 %v297
        %v299 = vand.u32 %v236, 4294901760
        %300 = vmatprep.subr.mxu0 %v299
        %v301 = vand.u32 %v235, 4294901760
        %302 = vmatpush1.msra.mxu0 %v301
        %303 = vmatprep.subr.mxu0 0.0
        %304 = vmatpush1.msra.mxu0 0.0
        %305 = vmatprep.subr.mxu0 0.0
        %306 = vmatpush1.msra.mxu0 0.0
        %307 = vmatprep.subr.mxu0 0.0
        %308 = vmatpush1.msra.mxu0 0.0
        %309 = vmatprep.subr.mxu0 0.0
        %310 = vmatpush1.msra.mxu0 0.0
        %311 = vmatprep.subr.mxu0 0.0
        %312 = vmatpush1.msra.mxu0 0.0
        %313 = vmatprep.subr.mxu0 0.0
        %314 = vmatpush1.msra.mxu0 0.0
        %315 = vmatprep.subr.mxu0 0.0
        %316 = vmatpush1.msra.mxu0 0.0
        %317 = vmatprep.subr.mxu0 0.0
        %318 = vmatpush1.msra.mxu0 0.0
        %319 = vmatprep.subr.mxu0 0.0
        %320 = vmatpush1.msra.mxu0 0.0
        %321 = vmatprep.subr.mxu0 0.0
        %322 = vmatpush1.msra.mxu0 0.0
        %323 = vmatprep.subr.mxu0 0.0
        %324 = vmatpush1.msra.mxu0 0.0
        %325 = vmatprep.subr.mxu0 0.0
        %326 = vmatpush1.msra.mxu0 0.0
        %327 = vmatprep.subr.mxu0 0.0
        %328 = vmatpush1.msra.mxu0 0.0
        %329 = vmatprep.subr.mxu0 0.0
        %330 = vmatpush1.msra.mxu0 0.0
        %331 = vmatprep.subr.mxu0 0.0
        %332 = vmatpush1.msra.mxu0 0.0
        %333 = vmatprep.subr.mxu0 0.0
        %334 = vmatpush1.msra.mxu0 0.0
        %335 = vmatprep.mubr.f32.mxu0 0.0
        %v336 = vand.u32 %v174, 4294901760
        %v337 = vsub.f32 %v174, %v336
        %v338 = vand.u32 %v337, 4294901760
        %v339 = vsub.f32 %v337, %v338
        %v340 = vand.u32 %v339, 4294901760
        %341 = vmatmul.mubr.f32.gmra.mrb[0].mxu0 %v340
        %v342 = vpop.f32.mrb[0].mxu0
        %v343 = vadd.f32 0.0, %v342
        %v344 = vpop.f32.mrb[0].mxu0
        %v345 = vadd.f32 0.0, %v344
        %346 = vdwg.mxu0
        %v347 = vand.u32 %v176, 4294901760
        %v348 = vsub.f32 %v176, %v347
        %v349 = vand.u32 %v348, 4294901760
        %v350 = vsub.f32 %v348, %v349
        %v351 = vand.u32 %v350, 4294901760
        %352 = vmatprep.subr.mxu0 %v351
        %v353 = vand.u32 %v175, 4294901760
        %v354 = vsub.f32 %v175, %v353
        %v355 = vand.u32 %v354, 4294901760
        %v356 = vsub.f32 %v354, %v355
        %v357 = vand.u32 %v356, 4294901760
        %358 = vmatpush1.msra.mxu0 %v357
        %v359 = vand.u32 %v180, 4294901760
        %v360 = vsub.f32 %v180, %v359
        %v361 = vand.u32 %v360, 4294901760
        %v362 = vsub.f32 %v360, %v361
        %v363 = vand.u32 %v362, 4294901760
        %364 = vmatprep.subr.mxu0 %v363
        %v365 = vand.u32 %v179, 4294901760
        %v366 = vsub.f32 %v179, %v365
        %v367 = vand.u32 %v366, 4294901760
        %v368 = vsub.f32 %v366, %v367
        %v369 = vand.u32 %v368, 4294901760
        %370 = vmatpush1.msra.mxu0 %v369
        %v371 = vand.u32 %v184, 4294901760
        %v372 = vsub.f32 %v184, %v371
        %v373 = vand.u32 %v372, 4294901760
        %v374 = vsub.f32 %v372, %v373
        %v375 = vand.u32 %v374, 4294901760
        %376 = vmatprep.subr.mxu0 %v375
        %v377 = vand.u32 %v183, 4294901760
        %v378 = vsub.f32 %v183, %v377
        %v379 = vand.u32 %v378, 4294901760
        %v380 = vsub.f32 %v378, %v379
        %v381 = vand.u32 %v380, 4294901760
        %382 = vmatpush1.msra.mxu0 %v381
        %v383 = vand.u32 %v188, 4294901760
        %v384 = vsub.f32 %v188, %v383
        %v385 = vand.u32 %v384, 4294901760
        %v386 = vsub.f32 %v384, %v385
        %v387 = vand.u32 %v386, 4294901760
        %388 = vmatprep.subr.mxu0 %v387
        %v389 = vand.u32 %v187, 4294901760
        %v390 = vsub.f32 %v187, %v389
        %v391 = vand.u32 %v390, 4294901760
        %v392 = vsub.f32 %v390, %v391
        %v393 = vand.u32 %v392, 4294901760
        %394 = vmatpush1.msra.mxu0 %v393
        %v395 = vand.u32 %v192, 4294901760
        %v396 = vsub.f32 %v192, %v395
        %v397 = vand.u32 %v396, 4294901760
        %v398 = vsub.f32 %v396, %v397
        %v399 = vand.u32 %v398, 4294901760
        %400 = vmatprep.subr.mxu0 %v399
        %v401 = vand.u32 %v191, 4294901760
        %v402 = vsub.f32 %v191, %v401
        %v403 = vand.u32 %v402, 4294901760
        %v404 = vsub.f32 %v402, %v403
        %v405 = vand.u32 %v404, 4294901760
        %406 = vmatpush1.msra.mxu0 %v405
        %v407 = vand.u32 %v196, 4294901760
        %v408 = vsub.f32 %v196, %v407
        %v409 = vand.u32 %v408, 4294901760
        %v410 = vsub.f32 %v408, %v409
        %v411 = vand.u32 %v410, 4294901760
        %412 = vmatprep.subr.mxu0 %v411
        %v413 = vand.u32 %v195, 4294901760
        %v414 = vsub.f32 %v195, %v413
        %v415 = vand.u32 %v414, 4294901760
        %v416 = vsub.f32 %v414, %v415
        %v417 = vand.u32 %v416, 4294901760
        %418 = vmatpush1.msra.mxu0 %v417
        %v419 = vand.u32 %v200, 4294901760
        %v420 = vsub.f32 %v200, %v419
        %v421 = vand.u32 %v420, 4294901760
        %v422 = vsub.f32 %v420, %v421
        %v423 = vand.u32 %v422, 4294901760
        %424 = vmatprep.subr.mxu0 %v423
        %v425 = vand.u32 %v199, 4294901760
        %v426 = vsub.f32 %v199, %v425
        %v427 = vand.u32 %v426, 4294901760
        %v428 = vsub.f32 %v426, %v427
        %v429 = vand.u32 %v428, 4294901760
        %430 = vmatpush1.msra.mxu0 %v429
        %v431 = vand.u32 %v204, 4294901760
        %v432 = vsub.f32 %v204, %v431
        %v433 = vand.u32 %v432, 4294901760
        %v434 = vsub.f32 %v432, %v433
        %v435 = vand.u32 %v434, 4294901760
        %436 = vmatprep.subr.mxu0 %v435
        %v437 = vand.u32 %v203, 4294901760
        %v438 = vsub.f32 %v203, %v437
        %v439 = vand.u32 %v438, 4294901760
        %v440 = vsub.f32 %v438, %v439
        %v441 = vand.u32 %v440, 4294901760
        %442 = vmatpush1.msra.mxu0 %v441
        %v443 = vand.u32 %v208, 4294901760
        %v444 = vsub.f32 %v208, %v443
        %v445 = vand.u32 %v444, 4294901760
        %v446 = vsub.f32 %v444, %v445
        %v447 = vand.u32 %v446, 4294901760
        %448 = vmatprep.subr.mxu0 %v447
        %v449 = vand.u32 %v207, 4294901760
        %v450 = vsub.f32 %v207, %v449
        %v451 = vand.u32 %v450, 4294901760
        %v452 = vsub.f32 %v450, %v451
        %v453 = vand.u32 %v452, 4294901760
        %454 = vmatpush1.msra.mxu0 %v453
        %v455 = vand.u32 %v212, 4294901760
        %v456 = vsub.f32 %v212, %v455
        %v457 = vand.u32 %v456, 4294901760
        %v458 = vsub.f32 %v456, %v457
        %v459 = vand.u32 %v458, 4294901760
        %460 = vmatprep.subr.mxu0 %v459
        %v461 = vand.u32 %v211, 4294901760
        %v462 = vsub.f32 %v211, %v461
        %v463 = vand.u32 %v462, 4294901760
        %v464 = vsub.f32 %v462, %v463
        %v465 = vand.u32 %v464, 4294901760
        %466 = vmatpush1.msra.mxu0 %v465
        %v467 = vand.u32 %v216, 4294901760
        %v468 = vsub.f32 %v216, %v467
        %v469 = vand.u32 %v468, 4294901760
        %v470 = vsub.f32 %v468, %v469
        %v471 = vand.u32 %v470, 4294901760
        %472 = vmatprep.subr.mxu0 %v471
        %v473 = vand.u32 %v215, 4294901760
        %v474 = vsub.f32 %v215, %v473
        %v475 = vand.u32 %v474, 4294901760
        %v476 = vsub.f32 %v474, %v475
        %v477 = vand.u32 %v476, 4294901760
        %478 = vmatpush1.msra.mxu0 %v477
        %v479 = vand.u32 %v220, 4294901760
        %v480 = vsub.f32 %v220, %v479
        %v481 = vand.u32 %v480, 4294901760
        %v482 = vsub.f32 %v480, %v481
        %v483 = vand.u32 %v482, 4294901760
        %484 = vmatprep.subr.mxu0 %v483
        %v485 = vand.u32 %v219, 4294901760
        %v486 = vsub.f32 %v219, %v485
        %v487 = vand.u32 %v486, 4294901760
        %v488 = vsub.f32 %v486, %v487
        %v489 = vand.u32 %v488, 4294901760
        %490 = vmatpush1.msra.mxu0 %v489
        %v491 = vand.u32 %v224, 4294901760
        %v492 = vsub.f32 %v224, %v491
        %v493 = vand.u32 %v492, 4294901760
        %v494 = vsub.f32 %v492, %v493
        %v495 = vand.u32 %v494, 4294901760
        %496 = vmatprep.subr.mxu0 %v495
        %v497 = vand.u32 %v223, 4294901760
        %v498 = vsub.f32 %v223, %v497
        %v499 = vand.u32 %v498, 4294901760
        %v500 = vsub.f32 %v498, %v499
        %v501 = vand.u32 %v500, 4294901760
        %502 = vmatpush1.msra.mxu0 %v501
        %v503 = vand.u32 %v228, 4294901760
        %v504 = vsub.f32 %v228, %v503
        %v505 = vand.u32 %v504, 4294901760
        %v506 = vsub.f32 %v504, %v505
        %v507 = vand.u32 %v506, 4294901760
        %508 = vmatprep.subr.mxu0 %v507
        %v509 = vand.u32 %v227, 4294901760
        %v510 = vsub.f32 %v227, %v509
        %v511 = vand.u32 %v510, 4294901760
        %v512 = vsub.f32 %v510, %v511
        %v513 = vand.u32 %v512, 4294901760
        %514 = vmatpush1.msra.mxu0 %v513
        %v515 = vand.u32 %v232, 4294901760
        %v516 = vsub.f32 %v232, %v515
        %v517 = vand.u32 %v516, 4294901760
        %v518 = vsub.f32 %v516, %v517
        %v519 = vand.u32 %v518, 4294901760
        %520 = vmatprep.subr.mxu0 %v519
        %v521 = vand.u32 %v231, 4294901760
        %v522 = vsub.f32 %v231, %v521
        %v523 = vand.u32 %v522, 4294901760
        %v524 = vsub.f32 %v522, %v523
        %v525 = vand.u32 %v524, 4294901760
        %526 = vmatpush1.msra.mxu0 %v525
        %v527 = vand.u32 %v236, 4294901760
        %v528 = vsub.f32 %v236, %v527
        %v529 = vand.u32 %v528, 4294901760
        %v530 = vsub.f32 %v528, %v529
        %v531 = vand.u32 %v530, 4294901760
        %532 = vmatprep.subr.mxu0 %v531
        %v533 = vand.u32 %v235, 4294901760
        %v534 = vsub.f32 %v235, %v533
        %v535 = vand.u32 %v534, 4294901760
        %v536 = vsub.f32 %v534, %v535
        %v537 = vand.u32 %v536, 4294901760
        %538 = vmatpush1.msra.mxu0 %v537
        %539 = vmatprep.subr.mxu0 0.0
        %540 = vmatpush1.msra.mxu0 0.0
        %541 = vmatprep.subr.mxu0 0.0
        %542 = vmatpush1.msra.mxu0 0.0
        %543 = vmatprep.subr.mxu0 0.0
        %544 = vmatpush1.msra.mxu0 0.0
        %545 = vmatprep.subr.mxu0 0.0
        %546 = vmatpush1.msra.mxu0 0.0
        %547 = vmatprep.subr.mxu0 0.0
        %548 = vmatpush1.msra.mxu0 0.0
        %549 = vmatprep.subr.mxu0 0.0
        %550 = vmatpush1.msra.mxu0 0.0
        %551 = vmatprep.subr.mxu0 0.0
        %552 = vmatpush1.msra.mxu0 0.0
        %553 = vmatprep.subr.mxu0 0.0
        %554 = vmatpush1.msra.mxu0 0.0
        %555 = vmatprep.subr.mxu0 0.0
        %556 = vmatpush1.msra.mxu0 0.0
        %557 = vmatprep.subr.mxu0 0.0
        %558 = vmatpush1.msra.mxu0 0.0
        %559 = vmatprep.subr.mxu0 0.0
        %560 = vmatpush1.msra.mxu0 0.0
        %561 = vmatprep.subr.mxu0 0.0
        %562 = vmatpush1.msra.mxu0 0.0
        %563 = vmatprep.subr.mxu0 0.0
        %564 = vmatpush1.msra.mxu0 0.0
        %565 = vmatprep.subr.mxu0 0.0
        %566 = vmatpush1.msra.mxu0 0.0
        %567 = vmatprep.subr.mxu0 0.0
        %568 = vmatpush1.msra.mxu0 0.0
        %569 = vmatprep.subr.mxu0 0.0
        %570 = vmatpush1.msra.mxu0 0.0
        %571 = vmatprep.mubr.f32.mxu0 0.0
        %v572 = vand.u32 %v174, 4294901760
        %573 = vmatmul.mubr.f32.gmra.mrb[0].mxu0 %v572
        %v574 = vpop.f32.mrb[0].mxu0
        %v575 = vadd.f32 %v343, %v574
        %v576 = vpop.f32.mrb[0].mxu0
        %v577 = vadd.f32 %v345, %v576
        %578 = vdwg.mxu0
        %v579 = vand.u32 %v176, 4294901760
        %v580 = vsub.f32 %v176, %v579
        %581 = vmatprep.subr.mxu0 %v580
        %v582 = vand.u32 %v175, 4294901760
        %v583 = vsub.f32 %v175, %v582
        %584 = vmatpush1.msra.mxu0 %v583
        %v585 = vand.u32 %v180, 4294901760
        %v586 = vsub.f32 %v180, %v585
        %587 = vmatprep.subr.mxu0 %v586
        %v588 = vand.u32 %v179, 4294901760
        %v589 = vsub.f32 %v179, %v588
        %590 = vmatpush1.msra.mxu0 %v589
        %v591 = vand.u32 %v184, 4294901760
        %v592 = vsub.f32 %v184, %v591
        %593 = vmatprep.subr.mxu0 %v592
        %v594 = vand.u32 %v183, 4294901760
        %v595 = vsub.f32 %v183, %v594
        %596 = vmatpush1.msra.mxu0 %v595
        %v597 = vand.u32 %v188, 4294901760
        %v598 = vsub.f32 %v188, %v597
        %599 = vmatprep.subr.mxu0 %v598
        %v600 = vand.u32 %v187, 4294901760
        %v601 = vsub.f32 %v187, %v600
        %602 = vmatpush1.msra.mxu0 %v601
        %v603 = vand.u32 %v192, 4294901760
        %v604 = vsub.f32 %v192, %v603
        %605 = vmatprep.subr.mxu0 %v604
        %v606 = vand.u32 %v191, 4294901760
        %v607 = vsub.f32 %v191, %v606
        %608 = vmatpush1.msra.mxu0 %v607
        %v609 = vand.u32 %v196, 4294901760
        %v610 = vsub.f32 %v196, %v609
        %611 = vmatprep.subr.mxu0 %v610
        %v612 = vand.u32 %v195, 4294901760
        %v613 = vsub.f32 %v195, %v612
        %614 = vmatpush1.msra.mxu0 %v613
        %v615 = vand.u32 %v200, 4294901760
        %v616 = vsub.f32 %v200, %v615
        %617 = vmatprep.subr.mxu0 %v616
        %v618 = vand.u32 %v199, 4294901760
        %v619 = vsub.f32 %v199, %v618
        %620 = vmatpush1.msra.mxu0 %v619
        %v621 = vand.u32 %v204, 4294901760
        %v622 = vsub.f32 %v204, %v621
        %623 = vmatprep.subr.mxu0 %v622
        %v624 = vand.u32 %v203, 4294901760
        %v625 = vsub.f32 %v203, %v624
        %626 = vmatpush1.msra.mxu0 %v625
        %v627 = vand.u32 %v208, 4294901760
        %v628 = vsub.f32 %v208, %v627
        %629 = vmatprep.subr.mxu0 %v628
        %v630 = vand.u32 %v207, 4294901760
        %v631 = vsub.f32 %v207, %v630
        %632 = vmatpush1.msra.mxu0 %v631
        %v633 = vand.u32 %v212, 4294901760
        %v634 = vsub.f32 %v212, %v633
        %635 = vmatprep.subr.mxu0 %v634
        %v636 = vand.u32 %v211, 4294901760
        %v637 = vsub.f32 %v211, %v636
        %638 = vmatpush1.msra.mxu0 %v637
        %v639 = vand.u32 %v216, 4294901760
        %v640 = vsub.f32 %v216, %v639
        %641 = vmatprep.subr.mxu0 %v640
        %v642 = vand.u32 %v215, 4294901760
        %v643 = vsub.f32 %v215, %v642
        %644 = vmatpush1.msra.mxu0 %v643
        %v645 = vand.u32 %v220, 4294901760
        %v646 = vsub.f32 %v220, %v645
        %647 = vmatprep.subr.mxu0 %v646
        %v648 = vand.u32 %v219, 4294901760
        %v649 = vsub.f32 %v219, %v648
        %650 = vmatpush1.msra.mxu0 %v649
        %v651 = vand.u32 %v224, 4294901760
        %v652 = vsub.f32 %v224, %v651
        %653 = vmatprep.subr.mxu0 %v652
        %v654 = vand.u32 %v223, 4294901760
        %v655 = vsub.f32 %v223, %v654
        %656 = vmatpush1.msra.mxu0 %v655
        %v657 = vand.u32 %v228, 4294901760
        %v658 = vsub.f32 %v228, %v657
        %659 = vmatprep.subr.mxu0 %v658
        %v660 = vand.u32 %v227, 4294901760
        %v661 = vsub.f32 %v227, %v660
        %662 = vmatpush1.msra.mxu0 %v661
        %v663 = vand.u32 %v232, 4294901760
        %v664 = vsub.f32 %v232, %v663
        %665 = vmatprep.subr.mxu0 %v664
        %v666 = vand.u32 %v231, 4294901760
        %v667 = vsub.f32 %v231, %v666
        %668 = vmatpush1.msra.mxu0 %v667
        %v669 = vand.u32 %v236, 4294901760
        %v670 = vsub.f32 %v236, %v669
        %671 = vmatprep.subr.mxu0 %v670
        %v672 = vand.u32 %v235, 4294901760
        %v673 = vsub.f32 %v235, %v672
        %674 = vmatpush1.msra.mxu0 %v673
        %675 = vmatprep.subr.mxu0 0.0
        %676 = vmatpush1.msra.mxu0 0.0
        %677 = vmatprep.subr.mxu0 0.0
        %678 = vmatpush1.msra.mxu0 0.0
        %679 = vmatprep.subr.mxu0 0.0
        %680 = vmatpush1.msra.mxu0 0.0
        %681 = vmatprep.subr.mxu0 0.0
        %682 = vmatpush1.msra.mxu0 0.0
        %683 = vmatprep.subr.mxu0 0.0
        %684 = vmatpush1.msra.mxu0 0.0
        %685 = vmatprep.subr.mxu0 0.0
        %686 = vmatpush1.msra.mxu0 0.0
        %687 = vmatprep.subr.mxu0 0.0
        %688 = vmatpush1.msra.mxu0 0.0
        %689 = vmatprep.subr.mxu0 0.0
        %690 = vmatpush1.msra.mxu0 0.0
        %691 = vmatprep.subr.mxu0 0.0
        %692 = vmatpush1.msra.mxu0 0.0
        %693 = vmatprep.subr.mxu0 0.0
        %694 = vmatpush1.msra.mxu0 0.0
        %695 = vmatprep.subr.mxu0 0.0
        %696 = vmatpush1.msra.mxu0 0.0
        %697 = vmatprep.subr.mxu0 0.0
        %698 = vmatpush1.msra.mxu0 0.0
        %699 = vmatprep.subr.mxu0 0.0
        %700 = vmatpush1.msra.mxu0 0.0
        %701 = vmatprep.subr.mxu0 0.0
        %702 = vmatpush1.msra.mxu0 0.0
        %703 = vmatprep.subr.mxu0 0.0
        %704 = vmatpush1.msra.mxu0 0.0
        %705 = vmatprep.subr.mxu0 0.0
        %706 = vmatpush1.msra.mxu0 0.0
        %707 = vmatprep.mubr.f32.mxu0 0.0
        %v708 = vand.u32 %v174, 4294901760
        %v709 = vsub.f32 %v174, %v708
        %710 = vmatmul.mubr.f32.gmra.mrb[0].mxu0 %v709
        %v711 = vpop.f32.mrb[0].mxu0
        %v712 = vadd.f32 %v575, %v711
        %v713 = vpop.f32.mrb[0].mxu0
        %v714 = vadd.f32 %v577, %v713
        %715 = vdwg.mxu0
        %v716 = vand.u32 %v176, 4294901760
        %717 = vmatprep.subr.mxu0 %v716
        %v718 = vand.u32 %v175, 4294901760
        %719 = vmatpush1.msra.mxu0 %v718
        %v720 = vand.u32 %v180, 4294901760
        %721 = vmatprep.subr.mxu0 %v720
        %v722 = vand.u32 %v179, 4294901760
        %723 = vmatpush1.msra.mxu0 %v722
        %v724 = vand.u32 %v184, 4294901760
        %725 = vmatprep.subr.mxu0 %v724
        %v726 = vand.u32 %v183, 4294901760
        %727 = vmatpush1.msra.mxu0 %v726
        %v728 = vand.u32 %v188, 4294901760
        %729 = vmatprep.subr.mxu0 %v728
        %v730 = vand.u32 %v187, 4294901760
        %731 = vmatpush1.msra.mxu0 %v730
        %v732 = vand.u32 %v192, 4294901760
        %733 = vmatprep.subr.mxu0 %v732
        %v734 = vand.u32 %v191, 4294901760
        %735 = vmatpush1.msra.mxu0 %v734
        %v736 = vand.u32 %v196, 4294901760
        %737 = vmatprep.subr.mxu0 %v736
        %v738 = vand.u32 %v195, 4294901760
        %739 = vmatpush1.msra.mxu0 %v738
        %v740 = vand.u32 %v200, 4294901760
        %741 = vmatprep.subr.mxu0 %v740
        %v742 = vand.u32 %v199, 4294901760
        %743 = vmatpush1.msra.mxu0 %v742
        %v744 = vand.u32 %v204, 4294901760
        %745 = vmatprep.subr.mxu0 %v744
        %v746 = vand.u32 %v203, 4294901760
        %747 = vmatpush1.msra.mxu0 %v746
        %v748 = vand.u32 %v208, 4294901760
        %749 = vmatprep.subr.mxu0 %v748
        %v750 = vand.u32 %v207, 4294901760
        %751 = vmatpush1.msra.mxu0 %v750
        %v752 = vand.u32 %v212, 4294901760
        %753 = vmatprep.subr.mxu0 %v752
        %v754 = vand.u32 %v211, 4294901760
        %755 = vmatpush1.msra.mxu0 %v754
        %v756 = vand.u32 %v216, 4294901760
        %757 = vmatprep.subr.mxu0 %v756
        %v758 = vand.u32 %v215, 4294901760
        %759 = vmatpush1.msra.mxu0 %v758
        %v760 = vand.u32 %v220, 4294901760
        %761 = vmatprep.subr.mxu0 %v760
        %v762 = vand.u32 %v219, 4294901760
        %763 = vmatpush1.msra.mxu0 %v762
        %v764 = vand.u32 %v224, 4294901760
        %765 = vmatprep.subr.mxu0 %v764
        %v766 = vand.u32 %v223, 4294901760
        %767 = vmatpush1.msra.mxu0 %v766
        %v768 = vand.u32 %v228, 4294901760
        %769 = vmatprep.subr.mxu0 %v768
        %v770 = vand.u32 %v227, 4294901760
        %771 = vmatpush1.msra.mxu0 %v770
        %v772 = vand.u32 %v232, 4294901760
        %773 = vmatprep.subr.mxu0 %v772
        %v774 = vand.u32 %v231, 4294901760
        %775 = vmatpush1.msra.mxu0 %v774
        %v776 = vand.u32 %v236, 4294901760
        %777 = vmatprep.subr.mxu0 %v776
        %v778 = vand.u32 %v235, 4294901760
        %779 = vmatpush1.msra.mxu0 %v778
        %780 = vmatprep.subr.mxu0 0.0
        %781 = vmatpush1.msra.mxu0 0.0
        %782 = vmatprep.subr.mxu0 0.0
        %783 = vmatpush1.msra.mxu0 0.0
        %784 = vmatprep.subr.mxu0 0.0
        %785 = vmatpush1.msra.mxu0 0.0
        %786 = vmatprep.subr.mxu0 0.0
        %787 = vmatpush1.msra.mxu0 0.0
        %788 = vmatprep.subr.mxu0 0.0
        %789 = vmatpush1.msra.mxu0 0.0
        %790 = vmatprep.subr.mxu0 0.0
        %791 = vmatpush1.msra.mxu0 0.0
        %792 = vmatprep.subr.mxu0 0.0
        %793 = vmatpush1.msra.mxu0 0.0
        %794 = vmatprep.subr.mxu0 0.0
        %795 = vmatpush1.msra.mxu0 0.0
        %796 = vmatprep.subr.mxu0 0.0
        %797 = vmatpush1.msra.mxu0 0.0
        %798 = vmatprep.subr.mxu0 0.0
        %799 = vmatpush1.msra.mxu0 0.0
        %800 = vmatprep.subr.mxu0 0.0
        %801 = vmatpush1.msra.mxu0 0.0
        %802 = vmatprep.subr.mxu0 0.0
        %803 = vmatpush1.msra.mxu0 0.0
        %804 = vmatprep.subr.mxu0 0.0
        %805 = vmatpush1.msra.mxu0 0.0
        %806 = vmatprep.subr.mxu0 0.0
        %807 = vmatpush1.msra.mxu0 0.0
        %808 = vmatprep.subr.mxu0 0.0
        %809 = vmatpush1.msra.mxu0 0.0
        %810 = vmatprep.subr.mxu0 0.0
        %811 = vmatpush1.msra.mxu0 0.0
        %812 = vmatprep.mubr.f32.mxu0 0.0
        %v813 = vand.u32 %v174, 4294901760
        %v814 = vsub.f32 %v174, %v813
        %v815 = vand.u32 %v814, 4294901760
        %816 = vmatmul.mubr.f32.gmra.mrb[0].mxu0 %v815
        %v817 = vpop.f32.mrb[0].mxu0
        %v818 = vadd.f32 %v712, %v817
        %v819 = vpop.f32.mrb[0].mxu0
        %v820 = vadd.f32 %v714, %v819
        %821 = vdwg.mxu0
        %v822 = vand.u32 %v176, 4294901760
        %v823 = vsub.f32 %v176, %v822
        %v824 = vand.u32 %v823, 4294901760
        %825 = vmatprep.subr.mxu0 %v824
        %v826 = vand.u32 %v175, 4294901760
        %v827 = vsub.f32 %v175, %v826
        %v828 = vand.u32 %v827, 4294901760
        %829 = vmatpush1.msra.mxu0 %v828
        %v830 = vand.u32 %v180, 4294901760
        %v831 = vsub.f32 %v180, %v830
        %v832 = vand.u32 %v831, 4294901760
        %833 = vmatprep.subr.mxu0 %v832
        %v834 = vand.u32 %v179, 4294901760
        %v835 = vsub.f32 %v179, %v834
        %v836 = vand.u32 %v835, 4294901760
        %837 = vmatpush1.msra.mxu0 %v836
        %v838 = vand.u32 %v184, 4294901760
        %v839 = vsub.f32 %v184, %v838
        %v840 = vand.u32 %v839, 4294901760
        %841 = vmatprep.subr.mxu0 %v840
        %v842 = vand.u32 %v183, 4294901760
        %v843 = vsub.f32 %v183, %v842
        %v844 = vand.u32 %v843, 4294901760
        %845 = vmatpush1.msra.mxu0 %v844
        %v846 = vand.u32 %v188, 4294901760
        %v847 = vsub.f32 %v188, %v846
        %v848 = vand.u32 %v847, 4294901760
        %849 = vmatprep.subr.mxu0 %v848
        %v850 = vand.u32 %v187, 4294901760
        %v851 = vsub.f32 %v187, %v850
        %v852 = vand.u32 %v851, 4294901760
        %853 = vmatpush1.msra.mxu0 %v852
        %v854 = vand.u32 %v192, 4294901760
        %v855 = vsub.f32 %v192, %v854
        %v856 = vand.u32 %v855, 4294901760
        %857 = vmatprep.subr.mxu0 %v856
        %v858 = vand.u32 %v191, 4294901760
        %v859 = vsub.f32 %v191, %v858
        %v860 = vand.u32 %v859, 4294901760
        %861 = vmatpush1.msra.mxu0 %v860
        %v862 = vand.u32 %v196, 4294901760
        %v863 = vsub.f32 %v196, %v862
        %v864 = vand.u32 %v863, 4294901760
        %865 = vmatprep.subr.mxu0 %v864
        %v866 = vand.u32 %v195, 4294901760
        %v867 = vsub.f32 %v195, %v866
        %v868 = vand.u32 %v867, 4294901760
        %869 = vmatpush1.msra.mxu0 %v868
        %v870 = vand.u32 %v200, 4294901760
        %v871 = vsub.f32 %v200, %v870
        %v872 = vand.u32 %v871, 4294901760
        %873 = vmatprep.subr.mxu0 %v872
        %v874 = vand.u32 %v199, 4294901760
        %v875 = vsub.f32 %v199, %v874
        %v876 = vand.u32 %v875, 4294901760
        %877 = vmatpush1.msra.mxu0 %v876
        %v878 = vand.u32 %v204, 4294901760
        %v879 = vsub.f32 %v204, %v878
        %v880 = vand.u32 %v879, 4294901760
        %881 = vmatprep.subr.mxu0 %v880
        %v882 = vand.u32 %v203, 4294901760
        %v883 = vsub.f32 %v203, %v882
        %v884 = vand.u32 %v883, 4294901760
        %885 = vmatpush1.msra.mxu0 %v884
        %v886 = vand.u32 %v208, 4294901760
        %v887 = vsub.f32 %v208, %v886
        %v888 = vand.u32 %v887, 4294901760
        %889 = vmatprep.subr.mxu0 %v888
        %v890 = vand.u32 %v207, 4294901760
        %v891 = vsub.f32 %v207, %v890
        %v892 = vand.u32 %v891, 4294901760
        %893 = vmatpush1.msra.mxu0 %v892
        %v894 = vand.u32 %v212, 4294901760
        %v895 = vsub.f32 %v212, %v894
        %v896 = vand.u32 %v895, 4294901760
        %897 = vmatprep.subr.mxu0 %v896
        %v898 = vand.u32 %v211, 4294901760
        %v899 = vsub.f32 %v211, %v898
        %v900 = vand.u32 %v899, 4294901760
        %901 = vmatpush1.msra.mxu0 %v900
        %v902 = vand.u32 %v216, 4294901760
        %v903 = vsub.f32 %v216, %v902
        %v904 = vand.u32 %v903, 4294901760
        %905 = vmatprep.subr.mxu0 %v904
        %v906 = vand.u32 %v215, 4294901760
        %v907 = vsub.f32 %v215, %v906
        %v908 = vand.u32 %v907, 4294901760
        %909 = vmatpush1.msra.mxu0 %v908
        %v910 = vand.u32 %v220, 4294901760
        %v911 = vsub.f32 %v220, %v910
        %v912 = vand.u32 %v911, 4294901760
        %913 = vmatprep.subr.mxu0 %v912
        %v914 = vand.u32 %v219, 4294901760
        %v915 = vsub.f32 %v219, %v914
        %v916 = vand.u32 %v915, 4294901760
        %917 = vmatpush1.msra.mxu0 %v916
        %v918 = vand.u32 %v224, 4294901760
        %v919 = vsub.f32 %v224, %v918
        %v920 = vand.u32 %v919, 4294901760
        %921 = vmatprep.subr.mxu0 %v920
        %v922 = vand.u32 %v223, 4294901760
        %v923 = vsub.f32 %v223, %v922
        %v924 = vand.u32 %v923, 4294901760
        %925 = vmatpush1.msra.mxu0 %v924
        %v926 = vand.u32 %v228, 4294901760
        %v927 = vsub.f32 %v228, %v926
        %v928 = vand.u32 %v927, 4294901760
        %929 = vmatprep.subr.mxu0 %v928
        %v930 = vand.u32 %v227, 4294901760
        %v931 = vsub.f32 %v227, %v930
        %v932 = vand.u32 %v931, 4294901760
        %933 = vmatpush1.msra.mxu0 %v932
        %v934 = vand.u32 %v232, 4294901760
        %v935 = vsub.f32 %v232, %v934
        %v936 = vand.u32 %v935, 4294901760
        %937 = vmatprep.subr.mxu0 %v936
        %v938 = vand.u32 %v231, 4294901760
        %v939 = vsub.f32 %v231, %v938
        %v940 = vand.u32 %v939, 4294901760
        %941 = vmatpush1.msra.mxu0 %v940
        %v942 = vand.u32 %v236, 4294901760
        %v943 = vsub.f32 %v236, %v942
        %v944 = vand.u32 %v943, 4294901760
        %945 = vmatprep.subr.mxu0 %v944
        %v946 = vand.u32 %v235, 4294901760
        %v947 = vsub.f32 %v235, %v946
        %v948 = vand.u32 %v947, 4294901760
        %949 = vmatpush1.msra.mxu0 %v948
        %950 = vmatprep.subr.mxu0 0.0
        %951 = vmatpush1.msra.mxu0 0.0
        %952 = vmatprep.subr.mxu0 0.0
        %953 = vmatpush1.msra.mxu0 0.0
        %954 = vmatprep.subr.mxu0 0.0
        %955 = vmatpush1.msra.mxu0 0.0
        %956 = vmatprep.subr.mxu0 0.0
        %957 = vmatpush1.msra.mxu0 0.0
        %958 = vmatprep.subr.mxu0 0.0
        %959 = vmatpush1.msra.mxu0 0.0
        %960 = vmatprep.subr.mxu0 0.0
        %961 = vmatpush1.msra.mxu0 0.0
        %962 = vmatprep.subr.mxu0 0.0
        %963 = vmatpush1.msra.mxu0 0.0
        %964 = vmatprep.subr.mxu0 0.0
        %965 = vmatpush1.msra.mxu0 0.0
        %966 = vmatprep.subr.mxu0 0.0
        %967 = vmatpush1.msra.mxu0 0.0
        %968 = vmatprep.subr.mxu0 0.0
        %969 = vmatpush1.msra.mxu0 0.0
        %970 = vmatprep.subr.mxu0 0.0
        %971 = vmatpush1.msra.mxu0 0.0
        %972 = vmatprep.subr.mxu0 0.0
        %973 = vmatpush1.msra.mxu0 0.0
        %974 = vmatprep.subr.mxu0 0.0
        %975 = vmatpush1.msra.mxu0 0.0
        %976 = vmatprep.subr.mxu0 0.0
        %977 = vmatpush1.msra.mxu0 0.0
        %978 = vmatprep.subr.mxu0 0.0
        %979 = vmatpush1.msra.mxu0 0.0
        %980 = vmatprep.subr.mxu0 0.0
        %981 = vmatpush1.msra.mxu0 0.0
        %982 = vmatprep.mubr.f32.mxu0 0.0
        %v983 = vand.u32 %v174, 4294901760
        %984 = vmatmul.mubr.f32.gmra.mrb[0].mxu0 %v983
        %v985 = vpop.f32.mrb[0].mxu0
        %v986 = vadd.f32 %v818, %v985
        %v987 = vpop.f32.mrb[0].mxu0
        %v988 = vadd.f32 %v820, %v987
        %989 = vdwg.mxu0
        %v990 = vand.u32 %v176, 4294901760
        %991 = vmatprep.subr.mxu0 %v990
        %v992 = vand.u32 %v175, 4294901760
        %993 = vmatpush1.msra.mxu0 %v992
        %v994 = vand.u32 %v180, 4294901760
        %995 = vmatprep.subr.mxu0 %v994
        %v996 = vand.u32 %v179, 4294901760
        %997 = vmatpush1.msra.mxu0 %v996
        %v998 = vand.u32 %v184, 4294901760
        %999 = vmatprep.subr.mxu0 %v998
        %v1000 = vand.u32 %v183, 4294901760
        %1001 = vmatpush1.msra.mxu0 %v1000
        %v1002 = vand.u32 %v188, 4294901760
        %1003 = vmatprep.subr.mxu0 %v1002
        %v1004 = vand.u32 %v187, 4294901760
        %1005 = vmatpush1.msra.mxu0 %v1004
        %v1006 = vand.u32 %v192, 4294901760
        %1007 = vmatprep.subr.mxu0 %v1006
        %v1008 = vand.u32 %v191, 4294901760
        %1009 = vmatpush1.msra.mxu0 %v1008
        %v1010 = vand.u32 %v196, 4294901760
        %1011 = vmatprep.subr.mxu0 %v1010
        %v1012 = vand.u32 %v195, 4294901760
        %1013 = vmatpush1.msra.mxu0 %v1012
        %v1014 = vand.u32 %v200, 4294901760
        %1015 = vmatprep.subr.mxu0 %v1014
        %v1016 = vand.u32 %v199, 4294901760
        %1017 = vmatpush1.msra.mxu0 %v1016
        %v1018 = vand.u32 %v204, 4294901760
        %1019 = vmatprep.subr.mxu0 %v1018
        %v1020 = vand.u32 %v203, 4294901760
        %1021 = vmatpush1.msra.mxu0 %v1020
        %v1022 = vand.u32 %v208, 4294901760
        %1023 = vmatprep.subr.mxu0 %v1022
        %v1024 = vand.u32 %v207, 4294901760
        %1025 = vmatpush1.msra.mxu0 %v1024
        %v1026 = vand.u32 %v212, 4294901760
        %1027 = vmatprep.subr.mxu0 %v1026
        %v1028 = vand.u32 %v211, 4294901760
        %1029 = vmatpush1.msra.mxu0 %v1028
        %v1030 = vand.u32 %v216, 4294901760
        %1031 = vmatprep.subr.mxu0 %v1030
        %v1032 = vand.u32 %v215, 4294901760
        %1033 = vmatpush1.msra.mxu0 %v1032
        %v1034 = vand.u32 %v220, 4294901760
        %1035 = vmatprep.subr.mxu0 %v1034
        %v1036 = vand.u32 %v219, 4294901760
        %1037 = vmatpush1.msra.mxu0 %v1036
        %v1038 = vand.u32 %v224, 4294901760
        %1039 = vmatprep.subr.mxu0 %v1038
        %v1040 = vand.u32 %v223, 4294901760
        %1041 = vmatpush1.msra.mxu0 %v1040
        %v1042 = vand.u32 %v228, 4294901760
        %1043 = vmatprep.subr.mxu0 %v1042
        %v1044 = vand.u32 %v227, 4294901760
        %1045 = vmatpush1.msra.mxu0 %v1044
        %v1046 = vand.u32 %v232, 4294901760
        %1047 = vmatprep.subr.mxu0 %v1046
        %v1048 = vand.u32 %v231, 4294901760
        %1049 = vmatpush1.msra.mxu0 %v1048
        %v1050 = vand.u32 %v236, 4294901760
        %1051 = vmatprep.subr.mxu0 %v1050
        %v1052 = vand.u32 %v235, 4294901760
        %1053 = vmatpush1.msra.mxu0 %v1052
        %1054 = vmatprep.subr.mxu0 0.0
        %1055 = vmatpush1.msra.mxu0 0.0
        %1056 = vmatprep.subr.mxu0 0.0
        %1057 = vmatpush1.msra.mxu0 0.0
        %1058 = vmatprep.subr.mxu0 0.0
        %1059 = vmatpush1.msra.mxu0 0.0
        %1060 = vmatprep.subr.mxu0 0.0
        %1061 = vmatpush1.msra.mxu0 0.0
        %1062 = vmatprep.subr.mxu0 0.0
        %1063 = vmatpush1.msra.mxu0 0.0
        %1064 = vmatprep.subr.mxu0 0.0
        %1065 = vmatpush1.msra.mxu0 0.0
        %1066 = vmatprep.subr.mxu0 0.0
        %1067 = vmatpush1.msra.mxu0 0.0
        %1068 = vmatprep.subr.mxu0 0.0
        %1069 = vmatpush1.msra.mxu0 0.0
        %1070 = vmatprep.subr.mxu0 0.0
        %1071 = vmatpush1.msra.mxu0 0.0
        %1072 = vmatprep.subr.mxu0 0.0
        %1073 = vmatpush1.msra.mxu0 0.0
        %1074 = vmatprep.subr.mxu0 0.0
        %1075 = vmatpush1.msra.mxu0 0.0
        %1076 = vmatprep.subr.mxu0 0.0
        %1077 = vmatpush1.msra.mxu0 0.0
        %1078 = vmatprep.subr.mxu0 0.0
        %1079 = vmatpush1.msra.mxu0 0.0
        %1080 = vmatprep.subr.mxu0 0.0
        %1081 = vmatpush1.msra.mxu0 0.0
        %1082 = vmatprep.subr.mxu0 0.0
        %1083 = vmatpush1.msra.mxu0 0.0
        %1084 = vmatprep.subr.mxu0 0.0
        %1085 = vmatpush1.msra.mxu0 0.0
        %1086 = vmatprep.mubr.f32.mxu0 0.0
        %v1087 = vand.u32 %v174, 4294901760
        %1088 = vmatmul.mubr.f32.gmra.mrb[0].mxu0 %v1087
        %v1089 = vpop.f32.mrb[0].mxu0
        %v1090 = vadd.f32 %v986, %v1089
        %v1091 = vpop.f32.mrb[0].mxu0
        %v1092 = vadd.f32 %v988, %v1091
        %1093 = vdwg.mxu0
        %v1094 = vand.u32 %v178, 4294901760
        %1095 = vmatprep.subr.mxu0 %v1094
        %v1096 = vand.u32 %v177, 4294901760
        %1097 = vmatpush1.msra.mxu0 %v1096
        %v1098 = vand.u32 %v182, 4294901760
        %1099 = vmatprep.subr.mxu0 %v1098
        %v1100 = vand.u32 %v181, 4294901760
        %1101 = vmatpush1.msra.mxu0 %v1100
        %v1102 = vand.u32 %v186, 4294901760
        %1103 = vmatprep.subr.mxu0 %v1102
        %v1104 = vand.u32 %v185, 4294901760
        %1105 = vmatpush1.msra.mxu0 %v1104
        %v1106 = vand.u32 %v190, 4294901760
        %1107 = vmatprep.subr.mxu0 %v1106
        %v1108 = vand.u32 %v189, 4294901760
        %1109 = vmatpush1.msra.mxu0 %v1108
        %v1110 = vand.u32 %v194, 4294901760
        %1111 = vmatprep.subr.mxu0 %v1110
        %v1112 = vand.u32 %v193, 4294901760
        %1113 = vmatpush1.msra.mxu0 %v1112
        %v1114 = vand.u32 %v198, 4294901760
        %1115 = vmatprep.subr.mxu0 %v1114
        %v1116 = vand.u32 %v197, 4294901760
        %1117 = vmatpush1.msra.mxu0 %v1116
        %v1118 = vand.u32 %v202, 4294901760
        %1119 = vmatprep.subr.mxu0 %v1118
        %v1120 = vand.u32 %v201, 4294901760
        %1121 = vmatpush1.msra.mxu0 %v1120
        %v1122 = vand.u32 %v206, 4294901760
        %1123 = vmatprep.subr.mxu0 %v1122
        %v1124 = vand.u32 %v205, 4294901760
        %1125 = vmatpush1.msra.mxu0 %v1124
        %v1126 = vand.u32 %v210, 4294901760
        %1127 = vmatprep.subr.mxu0 %v1126
        %v1128 = vand.u32 %v209, 4294901760
        %1129 = vmatpush1.msra.mxu0 %v1128
        %v1130 = vand.u32 %v214, 4294901760
        %1131 = vmatprep.subr.mxu0 %v1130
        %v1132 = vand.u32 %v213, 4294901760
        %1133 = vmatpush1.msra.mxu0 %v1132
        %v1134 = vand.u32 %v218, 4294901760
        %1135 = vmatprep.subr.mxu0 %v1134
        %v1136 = vand.u32 %v217, 4294901760
        %1137 = vmatpush1.msra.mxu0 %v1136
        %v1138 = vand.u32 %v222, 4294901760
        %1139 = vmatprep.subr.mxu0 %v1138
        %v1140 = vand.u32 %v221, 4294901760
        %1141 = vmatpush1.msra.mxu0 %v1140
        %v1142 = vand.u32 %v226, 4294901760
        %1143 = vmatprep.subr.mxu0 %v1142
        %v1144 = vand.u32 %v225, 4294901760
        %1145 = vmatpush1.msra.mxu0 %v1144
        %v1146 = vand.u32 %v230, 4294901760
        %1147 = vmatprep.subr.mxu0 %v1146
        %v1148 = vand.u32 %v229, 4294901760
        %1149 = vmatpush1.msra.mxu0 %v1148
        %v1150 = vand.u32 %v234, 4294901760
        %1151 = vmatprep.subr.mxu0 %v1150
        %v1152 = vand.u32 %v233, 4294901760
        %1153 = vmatpush1.msra.mxu0 %v1152
        %v1154 = vand.u32 %v238, 4294901760
        %1155 = vmatprep.subr.mxu0 %v1154
        %v1156 = vand.u32 %v237, 4294901760
        %1157 = vmatpush1.msra.mxu0 %v1156
        %1158 = vmatprep.subr.mxu0 0.0
        %1159 = vmatpush1.msra.mxu0 0.0
        %1160 = vmatprep.subr.mxu0 0.0
        %1161 = vmatpush1.msra.mxu0 0.0
        %1162 = vmatprep.subr.mxu0 0.0
        %1163 = vmatpush1.msra.mxu0 0.0
        %1164 = vmatprep.subr.mxu0 0.0
        %1165 = vmatpush1.msra.mxu0 0.0
        %1166 = vmatprep.subr.mxu0 0.0
        %1167 = vmatpush1.msra.mxu0 0.0
        %1168 = vmatprep.subr.mxu0 0.0
        %1169 = vmatpush1.msra.mxu0 0.0
        %1170 = vmatprep.subr.mxu0 0.0
        %1171 = vmatpush1.msra.mxu0 0.0
        %1172 = vmatprep.subr.mxu0 0.0
        %1173 = vmatpush1.msra.mxu0 0.0
        %1174 = vmatprep.subr.mxu0 0.0
        %1175 = vmatpush1.msra.mxu0 0.0
        %1176 = vmatprep.subr.mxu0 0.0
        %1177 = vmatpush1.msra.mxu0 0.0
        %1178 = vmatprep.subr.mxu0 0.0
        %1179 = vmatpush1.msra.mxu0 0.0
        %1180 = vmatprep.subr.mxu0 0.0
        %1181 = vmatpush1.msra.mxu0 0.0
        %1182 = vmatprep.subr.mxu0 0.0
        %1183 = vmatpush1.msra.mxu0 0.0
        %1184 = vmatprep.subr.mxu0 0.0
        %1185 = vmatpush1.msra.mxu0 0.0
        %1186 = vmatprep.subr.mxu0 0.0
        %1187 = vmatpush1.msra.mxu0 0.0
        %1188 = vmatprep.subr.mxu0 0.0
        %1189 = vmatpush1.msra.mxu0 0.0
        %1190 = vmatprep.mubr.f32.mxu0 0.0
        %v1191 = vand.u32 %v174, 4294901760
        %v1192 = vsub.f32 %v174, %v1191
        %v1193 = vand.u32 %v1192, 4294901760
        %v1194 = vsub.f32 %v1192, %v1193
        %v1195 = vand.u32 %v1194, 4294901760
        %1196 = vmatmul.mubr.f32.gmra.mrb[0].mxu0 %v1195
        %v1197 = vpop.f32.mrb[0].mxu0
        %v1198 = vadd.f32 0.0, %v1197
        %v1199 = vpop.f32.mrb[0].mxu0
        %v1200 = vadd.f32 0.0, %v1199
        %1201 = vdwg.mxu0
        %v1202 = vand.u32 %v178, 4294901760
        %v1203 = vsub.f32 %v178, %v1202
        %v1204 = vand.u32 %v1203, 4294901760
        %v1205 = vsub.f32 %v1203, %v1204
        %v1206 = vand.u32 %v1205, 4294901760
        %1207 = vmatprep.subr.mxu0 %v1206
        %v1208 = vand.u32 %v177, 4294901760
        %v1209 = vsub.f32 %v177, %v1208
        %v1210 = vand.u32 %v1209, 4294901760
        %v1211 = vsub.f32 %v1209, %v1210
        %v1212 = vand.u32 %v1211, 4294901760
        %1213 = vmatpush1.msra.mxu0 %v1212
        %v1214 = vand.u32 %v182, 4294901760
        %v1215 = vsub.f32 %v182, %v1214
        %v1216 = vand.u32 %v1215, 4294901760
        %v1217 = vsub.f32 %v1215, %v1216
        %v1218 = vand.u32 %v1217, 4294901760
        %1219 = vmatprep.subr.mxu0 %v1218
        %v1220 = vand.u32 %v181, 4294901760
        %v1221 = vsub.f32 %v181, %v1220
        %v1222 = vand.u32 %v1221, 4294901760
        %v1223 = vsub.f32 %v1221, %v1222
        %v1224 = vand.u32 %v1223, 4294901760
        %1225 = vmatpush1.msra.mxu0 %v1224
        %v1226 = vand.u32 %v186, 4294901760
        %v1227 = vsub.f32 %v186, %v1226
        %v1228 = vand.u32 %v1227, 4294901760
        %v1229 = vsub.f32 %v1227, %v1228
        %v1230 = vand.u32 %v1229, 4294901760
        %1231 = vmatprep.subr.mxu0 %v1230
        %v1232 = vand.u32 %v185, 4294901760
        %v1233 = vsub.f32 %v185, %v1232
        %v1234 = vand.u32 %v1233, 4294901760
        %v1235 = vsub.f32 %v1233, %v1234
        %v1236 = vand.u32 %v1235, 4294901760
        %1237 = vmatpush1.msra.mxu0 %v1236
        %v1238 = vand.u32 %v190, 4294901760
        %v1239 = vsub.f32 %v190, %v1238
        %v1240 = vand.u32 %v1239, 4294901760
        %v1241 = vsub.f32 %v1239, %v1240
        %v1242 = vand.u32 %v1241, 4294901760
        %1243 = vmatprep.subr.mxu0 %v1242
        %v1244 = vand.u32 %v189, 4294901760
        %v1245 = vsub.f32 %v189, %v1244
        %v1246 = vand.u32 %v1245, 4294901760
        %v1247 = vsub.f32 %v1245, %v1246
        %v1248 = vand.u32 %v1247, 4294901760
        %1249 = vmatpush1.msra.mxu0 %v1248
        %v1250 = vand.u32 %v194, 4294901760
        %v1251 = vsub.f32 %v194, %v1250
        %v1252 = vand.u32 %v1251, 4294901760
        %v1253 = vsub.f32 %v1251, %v1252
        %v1254 = vand.u32 %v1253, 4294901760
        %1255 = vmatprep.subr.mxu0 %v1254
        %v1256 = vand.u32 %v193, 4294901760
        %v1257 = vsub.f32 %v193, %v1256
        %v1258 = vand.u32 %v1257, 4294901760
        %v1259 = vsub.f32 %v1257, %v1258
        %v1260 = vand.u32 %v1259, 4294901760
        %1261 = vmatpush1.msra.mxu0 %v1260
        %v1262 = vand.u32 %v198, 4294901760
        %v1263 = vsub.f32 %v198, %v1262
        %v1264 = vand.u32 %v1263, 4294901760
        %v1265 = vsub.f32 %v1263, %v1264
        %v1266 = vand.u32 %v1265, 4294901760
        %1267 = vmatprep.subr.mxu0 %v1266
        %v1268 = vand.u32 %v197, 4294901760
        %v1269 = vsub.f32 %v197, %v1268
        %v1270 = vand.u32 %v1269, 4294901760
        %v1271 = vsub.f32 %v1269, %v1270
        %v1272 = vand.u32 %v1271, 4294901760
        %1273 = vmatpush1.msra.mxu0 %v1272
        %v1274 = vand.u32 %v202, 4294901760
        %v1275 = vsub.f32 %v202, %v1274
        %v1276 = vand.u32 %v1275, 4294901760
        %v1277 = vsub.f32 %v1275, %v1276
        %v1278 = vand.u32 %v1277, 4294901760
        %1279 = vmatprep.subr.mxu0 %v1278
        %v1280 = vand.u32 %v201, 4294901760
        %v1281 = vsub.f32 %v201, %v1280
        %v1282 = vand.u32 %v1281, 4294901760
        %v1283 = vsub.f32 %v1281, %v1282
        %v1284 = vand.u32 %v1283, 4294901760
        %1285 = vmatpush1.msra.mxu0 %v1284
        %v1286 = vand.u32 %v206, 4294901760
        %v1287 = vsub.f32 %v206, %v1286
        %v1288 = vand.u32 %v1287, 4294901760
        %v1289 = vsub.f32 %v1287, %v1288
        %v1290 = vand.u32 %v1289, 4294901760
        %1291 = vmatprep.subr.mxu0 %v1290
        %v1292 = vand.u32 %v205, 4294901760
        %v1293 = vsub.f32 %v205, %v1292
        %v1294 = vand.u32 %v1293, 4294901760
        %v1295 = vsub.f32 %v1293, %v1294
        %v1296 = vand.u32 %v1295, 4294901760
        %1297 = vmatpush1.msra.mxu0 %v1296
        %v1298 = vand.u32 %v210, 4294901760
        %v1299 = vsub.f32 %v210, %v1298
        %v1300 = vand.u32 %v1299, 4294901760
        %v1301 = vsub.f32 %v1299, %v1300
        %v1302 = vand.u32 %v1301, 4294901760
        %1303 = vmatprep.subr.mxu0 %v1302
        %v1304 = vand.u32 %v209, 4294901760
        %v1305 = vsub.f32 %v209, %v1304
        %v1306 = vand.u32 %v1305, 4294901760
        %v1307 = vsub.f32 %v1305, %v1306
        %v1308 = vand.u32 %v1307, 4294901760
        %1309 = vmatpush1.msra.mxu0 %v1308
        %v1310 = vand.u32 %v214, 4294901760
        %v1311 = vsub.f32 %v214, %v1310
        %v1312 = vand.u32 %v1311, 4294901760
        %v1313 = vsub.f32 %v1311, %v1312
        %v1314 = vand.u32 %v1313, 4294901760
        %1315 = vmatprep.subr.mxu0 %v1314
        %v1316 = vand.u32 %v213, 4294901760
        %v1317 = vsub.f32 %v213, %v1316
        %v1318 = vand.u32 %v1317, 4294901760
        %v1319 = vsub.f32 %v1317, %v1318
        %v1320 = vand.u32 %v1319, 4294901760
        %1321 = vmatpush1.msra.mxu0 %v1320
        %v1322 = vand.u32 %v218, 4294901760
        %v1323 = vsub.f32 %v218, %v1322
        %v1324 = vand.u32 %v1323, 4294901760
        %v1325 = vsub.f32 %v1323, %v1324
        %v1326 = vand.u32 %v1325, 4294901760
        %1327 = vmatprep.subr.mxu0 %v1326
        %v1328 = vand.u32 %v217, 4294901760
        %v1329 = vsub.f32 %v217, %v1328
        %v1330 = vand.u32 %v1329, 4294901760
        %v1331 = vsub.f32 %v1329, %v1330
        %v1332 = vand.u32 %v1331, 4294901760
        %1333 = vmatpush1.msra.mxu0 %v1332
        %v1334 = vand.u32 %v222, 4294901760
        %v1335 = vsub.f32 %v222, %v1334
        %v1336 = vand.u32 %v1335, 4294901760
        %v1337 = vsub.f32 %v1335, %v1336
        %v1338 = vand.u32 %v1337, 4294901760
        %1339 = vmatprep.subr.mxu0 %v1338
        %v1340 = vand.u32 %v221, 4294901760
        %v1341 = vsub.f32 %v221, %v1340
        %v1342 = vand.u32 %v1341, 4294901760
        %v1343 = vsub.f32 %v1341, %v1342
        %v1344 = vand.u32 %v1343, 4294901760
        %1345 = vmatpush1.msra.mxu0 %v1344
        %v1346 = vand.u32 %v226, 4294901760
        %v1347 = vsub.f32 %v226, %v1346
        %v1348 = vand.u32 %v1347, 4294901760
        %v1349 = vsub.f32 %v1347, %v1348
        %v1350 = vand.u32 %v1349, 4294901760
        %1351 = vmatprep.subr.mxu0 %v1350
        %v1352 = vand.u32 %v225, 4294901760
        %v1353 = vsub.f32 %v225, %v1352
        %v1354 = vand.u32 %v1353, 4294901760
        %v1355 = vsub.f32 %v1353, %v1354
        %v1356 = vand.u32 %v1355, 4294901760
        %1357 = vmatpush1.msra.mxu0 %v1356
        %v1358 = vand.u32 %v230, 4294901760
        %v1359 = vsub.f32 %v230, %v1358
        %v1360 = vand.u32 %v1359, 4294901760
        %v1361 = vsub.f32 %v1359, %v1360
        %v1362 = vand.u32 %v1361, 4294901760
        %1363 = vmatprep.subr.mxu0 %v1362
        %v1364 = vand.u32 %v229, 4294901760
        %v1365 = vsub.f32 %v229, %v1364
        %v1366 = vand.u32 %v1365, 4294901760
        %v1367 = vsub.f32 %v1365, %v1366
        %v1368 = vand.u32 %v1367, 4294901760
        %1369 = vmatpush1.msra.mxu0 %v1368
        %v1370 = vand.u32 %v234, 4294901760
        %v1371 = vsub.f32 %v234, %v1370
        %v1372 = vand.u32 %v1371, 4294901760
        %v1373 = vsub.f32 %v1371, %v1372
        %v1374 = vand.u32 %v1373, 4294901760
        %1375 = vmatprep.subr.mxu0 %v1374
        %v1376 = vand.u32 %v233, 4294901760
        %v1377 = vsub.f32 %v233, %v1376
        %v1378 = vand.u32 %v1377, 4294901760
        %v1379 = vsub.f32 %v1377, %v1378
        %v1380 = vand.u32 %v1379, 4294901760
        %1381 = vmatpush1.msra.mxu0 %v1380
        %v1382 = vand.u32 %v238, 4294901760
        %v1383 = vsub.f32 %v238, %v1382
        %v1384 = vand.u32 %v1383, 4294901760
        %v1385 = vsub.f32 %v1383, %v1384
        %v1386 = vand.u32 %v1385, 4294901760
        %1387 = vmatprep.subr.mxu0 %v1386
        %v1388 = vand.u32 %v237, 4294901760
        %v1389 = vsub.f32 %v237, %v1388
        %v1390 = vand.u32 %v1389, 4294901760
        %v1391 = vsub.f32 %v1389, %v1390
        %v1392 = vand.u32 %v1391, 4294901760
        %1393 = vmatpush1.msra.mxu0 %v1392
        %1394 = vmatprep.subr.mxu0 0.0
        %1395 = vmatpush1.msra.mxu0 0.0
        %1396 = vmatprep.subr.mxu0 0.0
        %1397 = vmatpush1.msra.mxu0 0.0
        %1398 = vmatprep.subr.mxu0 0.0
        %1399 = vmatpush1.msra.mxu0 0.0
        %1400 = vmatprep.subr.mxu0 0.0
        %1401 = vmatpush1.msra.mxu0 0.0
        %1402 = vmatprep.subr.mxu0 0.0
        %1403 = vmatpush1.msra.mxu0 0.0
        %1404 = vmatprep.subr.mxu0 0.0
        %1405 = vmatpush1.msra.mxu0 0.0
        %1406 = vmatprep.subr.mxu0 0.0
        %1407 = vmatpush1.msra.mxu0 0.0
        %1408 = vmatprep.subr.mxu0 0.0
        %1409 = vmatpush1.msra.mxu0 0.0
        %1410 = vmatprep.subr.mxu0 0.0
        %1411 = vmatpush1.msra.mxu0 0.0
        %1412 = vmatprep.subr.mxu0 0.0
        %1413 = vmatpush1.msra.mxu0 0.0
        %1414 = vmatprep.subr.mxu0 0.0
        %1415 = vmatpush1.msra.mxu0 0.0
        %1416 = vmatprep.subr.mxu0 0.0
        %1417 = vmatpush1.msra.mxu0 0.0
        %1418 = vmatprep.subr.mxu0 0.0
        %1419 = vmatpush1.msra.mxu0 0.0
        %1420 = vmatprep.subr.mxu0 0.0
        %1421 = vmatpush1.msra.mxu0 0.0
        %1422 = vmatprep.subr.mxu0 0.0
        %1423 = vmatpush1.msra.mxu0 0.0
        %1424 = vmatprep.subr.mxu0 0.0
        %1425 = vmatpush1.msra.mxu0 0.0
        %1426 = vmatprep.mubr.f32.mxu0 0.0
        %v1427 = vand.u32 %v174, 4294901760
        %1428 = vmatmul.mubr.f32.gmra.mrb[0].mxu0 %v1427
        %v1429 = vpop.f32.mrb[0].mxu0
        %v1430 = vadd.f32 %v1198, %v1429
        %v1431 = vpop.f32.mrb[0].mxu0
        %v1432 = vadd.f32 %v1200, %v1431
        %1433 = vdwg.mxu0
        %v1434 = vand.u32 %v178, 4294901760
        %v1435 = vsub.f32 %v178, %v1434
        %1436 = vmatprep.subr.mxu0 %v1435
        %v1437 = vand.u32 %v177, 4294901760
        %v1438 = vsub.f32 %v177, %v1437
        %1439 = vmatpush1.msra.mxu0 %v1438
        %v1440 = vand.u32 %v182, 4294901760
        %v1441 = vsub.f32 %v182, %v1440
        %1442 = vmatprep.subr.mxu0 %v1441
        %v1443 = vand.u32 %v181, 4294901760
        %v1444 = vsub.f32 %v181, %v1443
        %1445 = vmatpush1.msra.mxu0 %v1444
        %v1446 = vand.u32 %v186, 4294901760
        %v1447 = vsub.f32 %v186, %v1446
        %1448 = vmatprep.subr.mxu0 %v1447
        %v1449 = vand.u32 %v185, 4294901760
        %v1450 = vsub.f32 %v185, %v1449
        %1451 = vmatpush1.msra.mxu0 %v1450
        %v1452 = vand.u32 %v190, 4294901760
        %v1453 = vsub.f32 %v190, %v1452
        %1454 = vmatprep.subr.mxu0 %v1453
        %v1455 = vand.u32 %v189, 4294901760
        %v1456 = vsub.f32 %v189, %v1455
        %1457 = vmatpush1.msra.mxu0 %v1456
        %v1458 = vand.u32 %v194, 4294901760
        %v1459 = vsub.f32 %v194, %v1458
        %1460 = vmatprep.subr.mxu0 %v1459
        %v1461 = vand.u32 %v193, 4294901760
        %v1462 = vsub.f32 %v193, %v1461
        %1463 = vmatpush1.msra.mxu0 %v1462
        %v1464 = vand.u32 %v198, 4294901760
        %v1465 = vsub.f32 %v198, %v1464
        %1466 = vmatprep.subr.mxu0 %v1465
        %v1467 = vand.u32 %v197, 4294901760
        %v1468 = vsub.f32 %v197, %v1467
        %1469 = vmatpush1.msra.mxu0 %v1468
        %v1470 = vand.u32 %v202, 4294901760
        %v1471 = vsub.f32 %v202, %v1470
        %1472 = vmatprep.subr.mxu0 %v1471
        %v1473 = vand.u32 %v201, 4294901760
        %v1474 = vsub.f32 %v201, %v1473
        %1475 = vmatpush1.msra.mxu0 %v1474
        %v1476 = vand.u32 %v206, 4294901760
        %v1477 = vsub.f32 %v206, %v1476
        %1478 = vmatprep.subr.mxu0 %v1477
        %v1479 = vand.u32 %v205, 4294901760
        %v1480 = vsub.f32 %v205, %v1479
        %1481 = vmatpush1.msra.mxu0 %v1480
        %v1482 = vand.u32 %v210, 4294901760
        %v1483 = vsub.f32 %v210, %v1482
        %1484 = vmatprep.subr.mxu0 %v1483
        %v1485 = vand.u32 %v209, 4294901760
        %v1486 = vsub.f32 %v209, %v1485
        %1487 = vmatpush1.msra.mxu0 %v1486
        %v1488 = vand.u32 %v214, 4294901760
        %v1489 = vsub.f32 %v214, %v1488
        %1490 = vmatprep.subr.mxu0 %v1489
        %v1491 = vand.u32 %v213, 4294901760
        %v1492 = vsub.f32 %v213, %v1491
        %1493 = vmatpush1.msra.mxu0 %v1492
        %v1494 = vand.u32 %v218, 4294901760
        %v1495 = vsub.f32 %v218, %v1494
        %1496 = vmatprep.subr.mxu0 %v1495
        %v1497 = vand.u32 %v217, 4294901760
        %v1498 = vsub.f32 %v217, %v1497
        %1499 = vmatpush1.msra.mxu0 %v1498
        %v1500 = vand.u32 %v222, 4294901760
        %v1501 = vsub.f32 %v222, %v1500
        %1502 = vmatprep.subr.mxu0 %v1501
        %v1503 = vand.u32 %v221, 4294901760
        %v1504 = vsub.f32 %v221, %v1503
        %1505 = vmatpush1.msra.mxu0 %v1504
        %v1506 = vand.u32 %v226, 4294901760
        %v1507 = vsub.f32 %v226, %v1506
        %1508 = vmatprep.subr.mxu0 %v1507
        %v1509 = vand.u32 %v225, 4294901760
        %v1510 = vsub.f32 %v225, %v1509
        %1511 = vmatpush1.msra.mxu0 %v1510
        %v1512 = vand.u32 %v230, 4294901760
        %v1513 = vsub.f32 %v230, %v1512
        %1514 = vmatprep.subr.mxu0 %v1513
        %v1515 = vand.u32 %v229, 4294901760
        %v1516 = vsub.f32 %v229, %v1515
        %1517 = vmatpush1.msra.mxu0 %v1516
        %v1518 = vand.u32 %v234, 4294901760
        %v1519 = vsub.f32 %v234, %v1518
        %1520 = vmatprep.subr.mxu0 %v1519
        %v1521 = vand.u32 %v233, 4294901760
        %v1522 = vsub.f32 %v233, %v1521
        %1523 = vmatpush1.msra.mxu0 %v1522
        %v1524 = vand.u32 %v238, 4294901760
        %v1525 = vsub.f32 %v238, %v1524
        %1526 = vmatprep.subr.mxu0 %v1525
        %v1527 = vand.u32 %v237, 4294901760
        %v1528 = vsub.f32 %v237, %v1527
        %1529 = vmatpush1.msra.mxu0 %v1528
        %1530 = vmatprep.subr.mxu0 0.0
        %1531 = vmatpush1.msra.mxu0 0.0
        %1532 = vmatprep.subr.mxu0 0.0
        %1533 = vmatpush1.msra.mxu0 0.0
        %1534 = vmatprep.subr.mxu0 0.0
        %1535 = vmatpush1.msra.mxu0 0.0
        %1536 = vmatprep.subr.mxu0 0.0
        %1537 = vmatpush1.msra.mxu0 0.0
        %1538 = vmatprep.subr.mxu0 0.0
        %1539 = vmatpush1.msra.mxu0 0.0
        %1540 = vmatprep.subr.mxu0 0.0
        %1541 = vmatpush1.msra.mxu0 0.0
        %1542 = vmatprep.subr.mxu0 0.0
        %1543 = vmatpush1.msra.mxu0 0.0
        %1544 = vmatprep.subr.mxu0 0.0
        %1545 = vmatpush1.msra.mxu0 0.0
        %1546 = vmatprep.subr.mxu0 0.0
        %1547 = vmatpush1.msra.mxu0 0.0
        %1548 = vmatprep.subr.mxu0 0.0
        %1549 = vmatpush1.msra.mxu0 0.0
        %1550 = vmatprep.subr.mxu0 0.0
        %1551 = vmatpush1.msra.mxu0 0.0
        %1552 = vmatprep.subr.mxu0 0.0
        %1553 = vmatpush1.msra.mxu0 0.0
        %1554 = vmatprep.subr.mxu0 0.0
        %1555 = vmatpush1.msra.mxu0 0.0
        %1556 = vmatprep.subr.mxu0 0.0
        %1557 = vmatpush1.msra.mxu0 0.0
        %1558 = vmatprep.subr.mxu0 0.0
        %1559 = vmatpush1.msra.mxu0 0.0
        %1560 = vmatprep.subr.mxu0 0.0
        %1561 = vmatpush1.msra.mxu0 0.0
        %1562 = vmatprep.mubr.f32.mxu0 0.0
        %v1563 = vand.u32 %v174, 4294901760
        %v1564 = vsub.f32 %v174, %v1563
        %1565 = vmatmul.mubr.f32.gmra.mrb[0].mxu0 %v1564
        %v1566 = vpop.f32.mrb[0].mxu0
        %v1567 = vadd.f32 %v1430, %v1566
        %v1568 = vpop.f32.mrb[0].mxu0
        %v1569 = vadd.f32 %v1432, %v1568
        %1570 = vdwg.mxu0
        %v1571 = vand.u32 %v178, 4294901760
        %1572 = vmatprep.subr.mxu0 %v1571
        %v1573 = vand.u32 %v177, 4294901760
        %1574 = vmatpush1.msra.mxu0 %v1573
        %v1575 = vand.u32 %v182, 4294901760
        %1576 = vmatprep.subr.mxu0 %v1575
        %v1577 = vand.u32 %v181, 4294901760
        %1578 = vmatpush1.msra.mxu0 %v1577
        %v1579 = vand.u32 %v186, 4294901760
        %1580 = vmatprep.subr.mxu0 %v1579
        %v1581 = vand.u32 %v185, 4294901760
        %1582 = vmatpush1.msra.mxu0 %v1581
        %v1583 = vand.u32 %v190, 4294901760
        %1584 = vmatprep.subr.mxu0 %v1583
        %v1585 = vand.u32 %v189, 4294901760
        %1586 = vmatpush1.msra.mxu0 %v1585
        %v1587 = vand.u32 %v194, 4294901760
        %1588 = vmatprep.subr.mxu0 %v1587
        %v1589 = vand.u32 %v193, 4294901760
        %1590 = vmatpush1.msra.mxu0 %v1589
        %v1591 = vand.u32 %v198, 4294901760
        %1592 = vmatprep.subr.mxu0 %v1591
        %v1593 = vand.u32 %v197, 4294901760
        %1594 = vmatpush1.msra.mxu0 %v1593
        %v1595 = vand.u32 %v202, 4294901760
        %1596 = vmatprep.subr.mxu0 %v1595
        %v1597 = vand.u32 %v201, 4294901760
        %1598 = vmatpush1.msra.mxu0 %v1597
        %v1599 = vand.u32 %v206, 4294901760
        %1600 = vmatprep.subr.mxu0 %v1599
        %v1601 = vand.u32 %v205, 4294901760
        %1602 = vmatpush1.msra.mxu0 %v1601
        %v1603 = vand.u32 %v210, 4294901760
        %1604 = vmatprep.subr.mxu0 %v1603
        %v1605 = vand.u32 %v209, 4294901760
        %1606 = vmatpush1.msra.mxu0 %v1605
        %v1607 = vand.u32 %v214, 4294901760
        %1608 = vmatprep.subr.mxu0 %v1607
        %v1609 = vand.u32 %v213, 4294901760
        %1610 = vmatpush1.msra.mxu0 %v1609
        %v1611 = vand.u32 %v218, 4294901760
        %1612 = vmatprep.subr.mxu0 %v1611
        %v1613 = vand.u32 %v217, 4294901760
        %1614 = vmatpush1.msra.mxu0 %v1613
        %v1615 = vand.u32 %v222, 4294901760
        %1616 = vmatprep.subr.mxu0 %v1615
        %v1617 = vand.u32 %v221, 4294901760
        %1618 = vmatpush1.msra.mxu0 %v1617
        %v1619 = vand.u32 %v226, 4294901760
        %1620 = vmatprep.subr.mxu0 %v1619
        %v1621 = vand.u32 %v225, 4294901760
        %1622 = vmatpush1.msra.mxu0 %v1621
        %v1623 = vand.u32 %v230, 4294901760
        %1624 = vmatprep.subr.mxu0 %v1623
        %v1625 = vand.u32 %v229, 4294901760
        %1626 = vmatpush1.msra.mxu0 %v1625
        %v1627 = vand.u32 %v234, 4294901760
        %1628 = vmatprep.subr.mxu0 %v1627
        %v1629 = vand.u32 %v233, 4294901760
        %1630 = vmatpush1.msra.mxu0 %v1629
        %v1631 = vand.u32 %v238, 4294901760
        %1632 = vmatprep.subr.mxu0 %v1631
        %v1633 = vand.u32 %v237, 4294901760
        %1634 = vmatpush1.msra.mxu0 %v1633
        %1635 = vmatprep.subr.mxu0 0.0
        %1636 = vmatpush1.msra.mxu0 0.0
        %1637 = vmatprep.subr.mxu0 0.0
        %1638 = vmatpush1.msra.mxu0 0.0
        %1639 = vmatprep.subr.mxu0 0.0
        %1640 = vmatpush1.msra.mxu0 0.0
        %1641 = vmatprep.subr.mxu0 0.0
        %1642 = vmatpush1.msra.mxu0 0.0
        %1643 = vmatprep.subr.mxu0 0.0
        %1644 = vmatpush1.msra.mxu0 0.0
        %1645 = vmatprep.subr.mxu0 0.0
        %1646 = vmatpush1.msra.mxu0 0.0
        %1647 = vmatprep.subr.mxu0 0.0
        %1648 = vmatpush1.msra.mxu0 0.0
        %1649 = vmatprep.subr.mxu0 0.0
        %1650 = vmatpush1.msra.mxu0 0.0
        %1651 = vmatprep.subr.mxu0 0.0
        %1652 = vmatpush1.msra.mxu0 0.0
        %1653 = vmatprep.subr.mxu0 0.0
        %1654 = vmatpush1.msra.mxu0 0.0
        %1655 = vmatprep.subr.mxu0 0.0
        %1656 = vmatpush1.msra.mxu0 0.0
        %1657 = vmatprep.subr.mxu0 0.0
        %1658 = vmatpush1.msra.mxu0 0.0
        %1659 = vmatprep.subr.mxu0 0.0
        %1660 = vmatpush1.msra.mxu0 0.0
        %1661 = vmatprep.subr.mxu0 0.0
        %1662 = vmatpush1.msra.mxu0 0.0
        %1663 = vmatprep.subr.mxu0 0.0
        %1664 = vmatpush1.msra.mxu0 0.0
        %1665 = vmatprep.subr.mxu0 0.0
        %1666 = vmatpush1.msra.mxu0 0.0
        %1667 = vmatprep.mubr.f32.mxu0 0.0
        %v1668 = vand.u32 %v174, 4294901760
        %v1669 = vsub.f32 %v174, %v1668
        %v1670 = vand.u32 %v1669, 4294901760
        %1671 = vmatmul.mubr.f32.gmra.mrb[0].mxu0 %v1670
        %v1672 = vpop.f32.mrb[0].mxu0
        %v1673 = vadd.f32 %v1567, %v1672
        %v1674 = vpop.f32.mrb[0].mxu0
        %v1675 = vadd.f32 %v1569, %v1674
        %1676 = vdwg.mxu0
        %v1677 = vand.u32 %v178, 4294901760
        %v1678 = vsub.f32 %v178, %v1677
        %v1679 = vand.u32 %v1678, 4294901760
        %1680 = vmatprep.subr.mxu0 %v1679
        %v1681 = vand.u32 %v177, 4294901760
        %v1682 = vsub.f32 %v177, %v1681
        %v1683 = vand.u32 %v1682, 4294901760
        %1684 = vmatpush1.msra.mxu0 %v1683
        %v1685 = vand.u32 %v182, 4294901760
        %v1686 = vsub.f32 %v182, %v1685
        %v1687 = vand.u32 %v1686, 4294901760
        %1688 = vmatprep.subr.mxu0 %v1687
        %v1689 = vand.u32 %v181, 4294901760
        %v1690 = vsub.f32 %v181, %v1689
        %v1691 = vand.u32 %v1690, 4294901760
        %1692 = vmatpush1.msra.mxu0 %v1691
        %v1693 = vand.u32 %v186, 4294901760
        %v1694 = vsub.f32 %v186, %v1693
        %v1695 = vand.u32 %v1694, 4294901760
        %1696 = vmatprep.subr.mxu0 %v1695
        %v1697 = vand.u32 %v185, 4294901760
        %v1698 = vsub.f32 %v185, %v1697
        %v1699 = vand.u32 %v1698, 4294901760
        %1700 = vmatpush1.msra.mxu0 %v1699
        %v1701 = vand.u32 %v190, 4294901760
        %v1702 = vsub.f32 %v190, %v1701
        %v1703 = vand.u32 %v1702, 4294901760
        %1704 = vmatprep.subr.mxu0 %v1703
        %v1705 = vand.u32 %v189, 4294901760
        %v1706 = vsub.f32 %v189, %v1705
        %v1707 = vand.u32 %v1706, 4294901760
        %1708 = vmatpush1.msra.mxu0 %v1707
        %v1709 = vand.u32 %v194, 4294901760
        %v1710 = vsub.f32 %v194, %v1709
        %v1711 = vand.u32 %v1710, 4294901760
        %1712 = vmatprep.subr.mxu0 %v1711
        %v1713 = vand.u32 %v193, 4294901760
        %v1714 = vsub.f32 %v193, %v1713
        %v1715 = vand.u32 %v1714, 4294901760
        %1716 = vmatpush1.msra.mxu0 %v1715
        %v1717 = vand.u32 %v198, 4294901760
        %v1718 = vsub.f32 %v198, %v1717
        %v1719 = vand.u32 %v1718, 4294901760
        %1720 = vmatprep.subr.mxu0 %v1719
        %v1721 = vand.u32 %v197, 4294901760
        %v1722 = vsub.f32 %v197, %v1721
        %v1723 = vand.u32 %v1722, 4294901760
        %1724 = vmatpush1.msra.mxu0 %v1723
        %v1725 = vand.u32 %v202, 4294901760
        %v1726 = vsub.f32 %v202, %v1725
        %v1727 = vand.u32 %v1726, 4294901760
        %1728 = vmatprep.subr.mxu0 %v1727
        %v1729 = vand.u32 %v201, 4294901760
        %v1730 = vsub.f32 %v201, %v1729
        %v1731 = vand.u32 %v1730, 4294901760
        %1732 = vmatpush1.msra.mxu0 %v1731
        %v1733 = vand.u32 %v206, 4294901760
        %v1734 = vsub.f32 %v206, %v1733
        %v1735 = vand.u32 %v1734, 4294901760
        %1736 = vmatprep.subr.mxu0 %v1735
        %v1737 = vand.u32 %v205, 4294901760
        %v1738 = vsub.f32 %v205, %v1737
        %v1739 = vand.u32 %v1738, 4294901760
        %1740 = vmatpush1.msra.mxu0 %v1739
        %v1741 = vand.u32 %v210, 4294901760
        %v1742 = vsub.f32 %v210, %v1741
        %v1743 = vand.u32 %v1742, 4294901760
        %1744 = vmatprep.subr.mxu0 %v1743
        %v1745 = vand.u32 %v209, 4294901760
        %v1746 = vsub.f32 %v209, %v1745
        %v1747 = vand.u32 %v1746, 4294901760
        %1748 = vmatpush1.msra.mxu0 %v1747
        %v1749 = vand.u32 %v214, 4294901760
        %v1750 = vsub.f32 %v214, %v1749
        %v1751 = vand.u32 %v1750, 4294901760
        %1752 = vmatprep.subr.mxu0 %v1751
        %v1753 = vand.u32 %v213, 4294901760
        %v1754 = vsub.f32 %v213, %v1753
        %v1755 = vand.u32 %v1754, 4294901760
        %1756 = vmatpush1.msra.mxu0 %v1755
        %v1757 = vand.u32 %v218, 4294901760
        %v1758 = vsub.f32 %v218, %v1757
        %v1759 = vand.u32 %v1758, 4294901760
        %1760 = vmatprep.subr.mxu0 %v1759
        %v1761 = vand.u32 %v217, 4294901760
        %v1762 = vsub.f32 %v217, %v1761
        %v1763 = vand.u32 %v1762, 4294901760
        %1764 = vmatpush1.msra.mxu0 %v1763
        %v1765 = vand.u32 %v222, 4294901760
        %v1766 = vsub.f32 %v222, %v1765
        %v1767 = vand.u32 %v1766, 4294901760
        %1768 = vmatprep.subr.mxu0 %v1767
        %v1769 = vand.u32 %v221, 4294901760
        %v1770 = vsub.f32 %v221, %v1769
        %v1771 = vand.u32 %v1770, 4294901760
        %1772 = vmatpush1.msra.mxu0 %v1771
        %v1773 = vand.u32 %v226, 4294901760
        %v1774 = vsub.f32 %v226, %v1773
        %v1775 = vand.u32 %v1774, 4294901760
        %1776 = vmatprep.subr.mxu0 %v1775
        %v1777 = vand.u32 %v225, 4294901760
        %v1778 = vsub.f32 %v225, %v1777
        %v1779 = vand.u32 %v1778, 4294901760
        %1780 = vmatpush1.msra.mxu0 %v1779
        %v1781 = vand.u32 %v230, 4294901760
        %v1782 = vsub.f32 %v230, %v1781
        %v1783 = vand.u32 %v1782, 4294901760
        %1784 = vmatprep.subr.mxu0 %v1783
        %v1785 = vand.u32 %v229, 4294901760
        %v1786 = vsub.f32 %v229, %v1785
        %v1787 = vand.u32 %v1786, 4294901760
        %1788 = vmatpush1.msra.mxu0 %v1787
        %v1789 = vand.u32 %v234, 4294901760
        %v1790 = vsub.f32 %v234, %v1789
        %v1791 = vand.u32 %v1790, 4294901760
        %1792 = vmatprep.subr.mxu0 %v1791
        %v1793 = vand.u32 %v233, 4294901760
        %v1794 = vsub.f32 %v233, %v1793
        %v1795 = vand.u32 %v1794, 4294901760
        %1796 = vmatpush1.msra.mxu0 %v1795
        %v1797 = vand.u32 %v238, 4294901760
        %v1798 = vsub.f32 %v238, %v1797
        %v1799 = vand.u32 %v1798, 4294901760
        %1800 = vmatprep.subr.mxu0 %v1799
        %v1801 = vand.u32 %v237, 4294901760
        %v1802 = vsub.f32 %v237, %v1801
        %v1803 = vand.u32 %v1802, 4294901760
        %1804 = vmatpush1.msra.mxu0 %v1803
        %1805 = vmatprep.subr.mxu0 0.0
        %1806 = vmatpush1.msra.mxu0 0.0
        %1807 = vmatprep.subr.mxu0 0.0
        %1808 = vmatpush1.msra.mxu0 0.0
        %1809 = vmatprep.subr.mxu0 0.0
        %1810 = vmatpush1.msra.mxu0 0.0
        %1811 = vmatprep.subr.mxu0 0.0
        %1812 = vmatpush1.msra.mxu0 0.0
        %1813 = vmatprep.subr.mxu0 0.0
        %1814 = vmatpush1.msra.mxu0 0.0
        %1815 = vmatprep.subr.mxu0 0.0
        %1816 = vmatpush1.msra.mxu0 0.0
        %1817 = vmatprep.subr.mxu0 0.0
        %1818 = vmatpush1.msra.mxu0 0.0
        %1819 = vmatprep.subr.mxu0 0.0
        %1820 = vmatpush1.msra.mxu0 0.0
        %1821 = vmatprep.subr.mxu0 0.0
        %1822 = vmatpush1.msra.mxu0 0.0
        %1823 = vmatprep.subr.mxu0 0.0
        %1824 = vmatpush1.msra.mxu0 0.0
        %1825 = vmatprep.subr.mxu0 0.0
        %1826 = vmatpush1.msra.mxu0 0.0
        %1827 = vmatprep.subr.mxu0 0.0
        %1828 = vmatpush1.msra.mxu0 0.0
        %1829 = vmatprep.subr.mxu0 0.0
        %1830 = vmatpush1.msra.mxu0 0.0
        %1831 = vmatprep.subr.mxu0 0.0
        %1832 = vmatpush1.msra.mxu0 0.0
        %1833 = vmatprep.subr.mxu0 0.0
        %1834 = vmatpush1.msra.mxu0 0.0
        %1835 = vmatprep.subr.mxu0 0.0
        %1836 = vmatpush1.msra.mxu0 0.0
        %1837 = vmatprep.mubr.f32.mxu0 0.0
        %v1838 = vand.u32 %v174, 4294901760
        %1839 = vmatmul.mubr.f32.gmra.mrb[0].mxu0 %v1838
        %v1840 = vpop.f32.mrb[0].mxu0
        %v1841 = vadd.f32 %v1673, %v1840
        %v1842 = vpop.f32.mrb[0].mxu0
        %v1843 = vadd.f32 %v1675, %v1842
        %1844 = vdwg.mxu0
        %v1845 = vand.u32 %v178, 4294901760
        %1846 = vmatprep.subr.mxu0 %v1845
        %v1847 = vand.u32 %v177, 4294901760
        %1848 = vmatpush1.msra.mxu0 %v1847
        %v1849 = vand.u32 %v182, 4294901760
        %1850 = vmatprep.subr.mxu0 %v1849
        %v1851 = vand.u32 %v181, 4294901760
        %1852 = vmatpush1.msra.mxu0 %v1851
        %v1853 = vand.u32 %v186, 4294901760
        %1854 = vmatprep.subr.mxu0 %v1853
        %v1855 = vand.u32 %v185, 4294901760
        %1856 = vmatpush1.msra.mxu0 %v1855
        %v1857 = vand.u32 %v190, 4294901760
        %1858 = vmatprep.subr.mxu0 %v1857
        %v1859 = vand.u32 %v189, 4294901760
        %1860 = vmatpush1.msra.mxu0 %v1859
        %v1861 = vand.u32 %v194, 4294901760
        %1862 = vmatprep.subr.mxu0 %v1861
        %v1863 = vand.u32 %v193, 4294901760
        %1864 = vmatpush1.msra.mxu0 %v1863
        %v1865 = vand.u32 %v198, 4294901760
        %1866 = vmatprep.subr.mxu0 %v1865
        %v1867 = vand.u32 %v197, 4294901760
        %1868 = vmatpush1.msra.mxu0 %v1867
        %v1869 = vand.u32 %v202, 4294901760
        %1870 = vmatprep.subr.mxu0 %v1869
        %v1871 = vand.u32 %v201, 4294901760
        %1872 = vmatpush1.msra.mxu0 %v1871
        %v1873 = vand.u32 %v206, 4294901760
        %1874 = vmatprep.subr.mxu0 %v1873
        %v1875 = vand.u32 %v205, 4294901760
        %1876 = vmatpush1.msra.mxu0 %v1875
        %v1877 = vand.u32 %v210, 4294901760
        %1878 = vmatprep.subr.mxu0 %v1877
        %v1879 = vand.u32 %v209, 4294901760
        %1880 = vmatpush1.msra.mxu0 %v1879
        %v1881 = vand.u32 %v214, 4294901760
        %1882 = vmatprep.subr.mxu0 %v1881
        %v1883 = vand.u32 %v213, 4294901760
        %1884 = vmatpush1.msra.mxu0 %v1883
        %v1885 = vand.u32 %v218, 4294901760
        %1886 = vmatprep.subr.mxu0 %v1885
        %v1887 = vand.u32 %v217, 4294901760
        %1888 = vmatpush1.msra.mxu0 %v1887
        %v1889 = vand.u32 %v222, 4294901760
        %1890 = vmatprep.subr.mxu0 %v1889
        %v1891 = vand.u32 %v221, 4294901760
        %1892 = vmatpush1.msra.mxu0 %v1891
        %v1893 = vand.u32 %v226, 4294901760
        %1894 = vmatprep.subr.mxu0 %v1893
        %v1895 = vand.u32 %v225, 4294901760
        %1896 = vmatpush1.msra.mxu0 %v1895
        %v1897 = vand.u32 %v230, 4294901760
        %1898 = vmatprep.subr.mxu0 %v1897
        %v1899 = vand.u32 %v229, 4294901760
        %1900 = vmatpush1.msra.mxu0 %v1899
        %v1901 = vand.u32 %v234, 4294901760
        %1902 = vmatprep.subr.mxu0 %v1901
        %v1903 = vand.u32 %v233, 4294901760
        %1904 = vmatpush1.msra.mxu0 %v1903
        %v1905 = vand.u32 %v238, 4294901760
        %1906 = vmatprep.subr.mxu0 %v1905
        %v1907 = vand.u32 %v237, 4294901760
        %1908 = vmatpush1.msra.mxu0 %v1907
        %1909 = vmatprep.subr.mxu0 0.0
        %1910 = vmatpush1.msra.mxu0 0.0
        %1911 = vmatprep.subr.mxu0 0.0
        %1912 = vmatpush1.msra.mxu0 0.0
        %1913 = vmatprep.subr.mxu0 0.0
        %1914 = vmatpush1.msra.mxu0 0.0
        %1915 = vmatprep.subr.mxu0 0.0
        %1916 = vmatpush1.msra.mxu0 0.0
        %1917 = vmatprep.subr.mxu0 0.0
        %1918 = vmatpush1.msra.mxu0 0.0
        %1919 = vmatprep.subr.mxu0 0.0
        %1920 = vmatpush1.msra.mxu0 0.0
        %1921 = vmatprep.subr.mxu0 0.0
        %1922 = vmatpush1.msra.mxu0 0.0
        %1923 = vmatprep.subr.mxu0 0.0
        %1924 = vmatpush1.msra.mxu0 0.0
        %1925 = vmatprep.subr.mxu0 0.0
        %1926 = vmatpush1.msra.mxu0 0.0
        %1927 = vmatprep.subr.mxu0 0.0
        %1928 = vmatpush1.msra.mxu0 0.0
        %1929 = vmatprep.subr.mxu0 0.0
        %1930 = vmatpush1.msra.mxu0 0.0
        %1931 = vmatprep.subr.mxu0 0.0
        %1932 = vmatpush1.msra.mxu0 0.0
        %1933 = vmatprep.subr.mxu0 0.0
        %1934 = vmatpush1.msra.mxu0 0.0
        %1935 = vmatprep.subr.mxu0 0.0
        %1936 = vmatpush1.msra.mxu0 0.0
        %1937 = vmatprep.subr.mxu0 0.0
        %1938 = vmatpush1.msra.mxu0 0.0
        %1939 = vmatprep.subr.mxu0 0.0
        %1940 = vmatpush1.msra.mxu0 0.0
        %1941 = vmatprep.mubr.f32.mxu0 0.0
        %v1942 = vand.u32 %v174, 4294901760
        %1943 = vmatmul.mubr.f32.gmra.mrb[0].mxu0 %v1942
        %v1944 = vpop.f32.mrb[0].mxu0
        %v1945 = vadd.f32 %v1841, %v1944
        %v1946 = vpop.f32.mrb[0].mxu0
        %v1947 = vadd.f32 %v1843, %v1946
        %1948 = vdwg.mxu0
        %1949 = vst [vmem:[%s173] sm:$0xff] %v1090
        %1950 = vst [vmem:[%s173 + $0x8] sm:$0xff] %v1092
        %1951 = vst [vmem:[%s173 + $0x10] sm:$0xff] %v1945
        %1952 = vst [vmem:[%s173 + $0x18] sm:$0xff] %v1947
        %s1953 = sand.u32 %s75, 1
        %s1954 = scalar_lea.sflag [#allocation4], %s1953
        %s1955 = sand.u32 %s75, 1
        %s1956 = smul.addr %s1955, 32
        %s1957 = scalar_lea.vmem [#allocation7], %s1956
        // Predicated region
        $region37: #{tpu_custom_call.1} parent=27 // pred_check
          %p1958 = pneg %p85
        $region38: #{tpu_custom_call.1} parent=27 // pred_check_branch
          %1960 = sbr.rel (%p1958) target = $region40
        $region39: #{tpu_custom_call.1} parent=27 // pred_region
          %s1962 = ssub.s32 512, 512
          %1963 = vsyncadd %s1954, %s1962
          %s1964 = smul.addr %s20, 4
          %s1965 = smul.addr %s1964, 128
          %s1966 = scalar_lea.hbm %s2, %s1965
          %s1968 = sshll.u32 %s1957, 4
          %s1969 = int_to_ptr.vmem [resolvable:$true] %s1968
          %1971 = dma.vmem_to_hbm [thread:$0]  %s1969, 512, %s1966, %s1954
        $region40: #{tpu_custom_call.1} parent=27 // pred_fallthru
          _
      $region28: #{tpu_custom_call.1} parent=5 // pred_fallthru
        _
      %p1972 = scmp.le.s32.totalorder 2, %s15
      // Predicated region
      $region41: #{tpu_custom_call.1} parent=5 // pred_check
        %p1973 = pneg %p1972
      $region42: #{tpu_custom_call.1} parent=5 // pred_check_branch
        %1975 = sbr.rel (%p1973) target = $region44
      $region43: #{tpu_custom_call.1} parent=5 // pred_region
        %s1976 = ssub.s32 %s15, 2
        // Predicated region
        $region45: #{tpu_custom_call.1} parent=43 // pred_check
          %p1977 = pneg %p91
        $region46: #{tpu_custom_call.1} parent=43 // pred_check_branch
          %1979 = sbr.rel (%p1977) target = $region48
        $region47: #{tpu_custom_call.1} parent=43 // pred_region
          %s1980 = sand.u32 %s76, 1
          %s1981 = scalar_lea.sflag [#allocation4], %s1980
          %s1982 = sand.u32 %s76, 1
          %s1983 = smul.addr %s1982, 32
          %s1984 = scalar_lea.vmem [#allocation7], %s1983
          %1985 = dma.done %s1981, 512
        $region48: #{tpu_custom_call.1} parent=43 // pred_fallthru
          _
      $region44: #{tpu_custom_call.1} parent=5 // pred_fallthru
        _
    $region6: #{tpu_custom_call.1} parent=1 // loop_footer
      %s19 = sadd.s32 1, %s15
    $region7: #{tpu_custom_call.1} parent=1 // loop_footer_branch
      %14 = sbr.rel target = $region3
    $region8: #{tpu_custom_call.1} parent=1 // loop_exit
      _
    %1986 = vsyncpa [#allocation3], 1
    %s1987 = scalar_lea.sflag [#allocation3], 1
    %1988 = vsyncpa %s1987, 1
    %1989 = vsyncpa [#allocation6], 1
    %1990 = vsyncpa [#allocation4], 1
    %s1991 = scalar_lea.sflag [#allocation4], 1
    %1992 = vsyncpa %s1991, 1

</llo_original>
